<compile_context>
chip_gen: v6e
topology: v6e:2x2x1
jax: 0.10.0
libtpu: 0.0.40
codegen_flags: <defaults>
</compile_context>

<pallas_src>
import jax
import jax.numpy as jnp
from jax.experimental import pallas as pl
from jax.experimental.pallas import tpu as pltpu

SELU_ALPHA = 1.6732632423543772
SELU_SCALE = 1.0507009873554805
BN_EPS = 1e-5


def _round_up(x, m):
    return (x + m - 1) // m * m


def _canvas_len(L, kernel_size, num_levels, dilation_c):
    # Lane-dense (multiple of 128) and >= max(L_new)+1 so every roll wrap-around
    # lane is a guaranteed-zero lane (lanes >= L / L_new are kept exactly zero).
    max_pad = (kernel_size - 1) * dilation_c ** (num_levels - 1)
    return _round_up(L + max_pad + 1, 128)


def _selu(z):
    return SELU_SCALE * jnp.where(z > 0, z, SELU_ALPHA * (jnp.exp(z) - 1.0))


# ---------------------------------------------------------------------------
# Kernel factory (one grid step == one DepthwiseNet level; level 0 also runs
# the firstConv + norm1 prologue under pl.when).
# ---------------------------------------------------------------------------
def make_ddstcn_kernel(B, C, L, Lp, K, num_levels, dilation_c):
    f32 = jnp.float32
    bf16 = jnp.bfloat16
    cntL = float(B * L)
    NEG = float(jnp.finfo(jnp.float32).min)

    def bn(v, gamma, beta, valid):
        # BatchNorm1d, per-batch (training-mode) statistics, biased variance.
        # `v` is zero outside valid lanes, so plain sums give masked stats.
        mean = jnp.sum(v, axis=(0, 2), keepdims=True) / cntL
        xc = jnp.where(valid, v - mean, 0.0)
        var = jnp.sum(xc * xc, axis=(0, 2), keepdims=True) / cntL
        return xc * jax.lax.rsqrt(var + BN_EPS) * gamma + jnp.where(valid, beta, 0.0)

    def chan_mix(w_bf16, x3, bias_c1):
        # Channel mixing y[b,o,n] = sum_c W[o,c] x[b,c,n] + bias[o]
        # as ONE MXU matmul: batches concatenated along lanes (128-aligned).
        xcat = jnp.concatenate([x3[b] for b in range(B)], axis=1).astype(bf16)
        y = jnp.dot(w_bf16, xcat, preferred_element_type=f32) + bias_c1
        return jnp.stack([y[:, b * Lp:(b + 1) * Lp] for b in range(B)], axis=0)

    def kernel(meta_ref, saw_ref, sab_ref,
               x_ref, fw3_ref, fb_ref, n1g_ref, n1b_ref,
               bng_ref, bnb_ref, dww_ref, dwb_ref,
               caw1_ref, cab1_ref, caw2_ref, cab2_ref,
               pwwt_ref, pwb_ref, linw_ref, linb_ref,
               out_ref, h_ref):
        lvl = pl.program_id(0)
        pos = jax.lax.broadcasted_iota(jnp.int32, (1, 1, Lp), 2)
        valid_L = pos < L

        # ---------------- prologue (level 0): firstConv + norm1 ----------------
        @pl.when(lvl == 0)
        def _():
            h_ref[...] = jnp.zeros((B, C, Lp), f32)
            h_ref[:, :, :L] = x_ref[...]
            xc = h_ref[...]                               # zero-extended (B, C, Lp)
            xm1 = pltpu.roll(xc, shift=1, axis=2)         # lane n <- x[n-1] (zero halo)
            xp1 = pltpu.roll(xc, shift=Lp - 1, axis=2)    # lane n <- x[n+1] (zero halo)
            xcat = jnp.concatenate([xm1, xc, xp1], axis=1)          # (B, 3C, Lp)
            conv = chan_mix(fw3_ref[...], xcat, fb_ref[...])        # fused 3-tap conv
            conv = jnp.where(valid_L, conv, 0.0)
            h_ref[...] = bn(conv, n1g_ref[...], n1b_ref[...], valid_L)

        # ---------------- one DepthwiseNet level ----------------
        h = h_ref[...]                                    # (B, C, Lp), lanes >= L are zero
        L_new = meta_ref[lvl]                             # L + (K-1)*dilation_c**lvl
        L_new_f = L_new.astype(f32)
        valid_Ln = pos < L_new

        xn = bn(h, bng_ref[0], bnb_ref[0], valid_L)

        # Depthwise dilated conv (groups=C): taps are lane rolls (XLU); the zero
        # lanes of the canvas provide the causal zero padding for free.
        dw_w = dww_ref[0]                                 # (K, C, 1)
        dwout = xn * dw_w[K - 1]                          # zero-shift tap
        for t in range(K - 1):
            shifted = jnp.zeros_like(xn)
            # TODO(synk): with a dynamic lane rotate this one-hot sum over levels
            # collapses to a single pltpu.roll; kept static for lowering safety.
            for lv in range(num_levels):
                sh = (K - 1 - t) * (dilation_c ** lv)
                flag = (lvl == lv).astype(f32)
                shifted = shifted + flag * pltpu.roll(xn, shift=sh, axis=2)
            dwout = dwout + shifted * dw_w[t]
        out = jnp.where(valid_Ln, _selu(dwout + dwb_ref[0]), 0.0)

        # CBAM channel attention (channel vectors stay sublane-major: (C, 1)).
        inv_ln = 1.0 / L_new_f
        avg3 = jnp.sum(out, axis=2, keepdims=True) * inv_ln                  # (B, C, 1)
        max3 = jnp.max(jnp.where(valid_Ln, out, NEG), axis=2, keepdims=True)  # (B, C, 1)
        w1 = caw1_ref[0]; b1 = cab1_ref[0]; w2 = caw2_ref[0]; b2 = cab2_ref[0]

        def mlp_col(v_c1):                                # (C, 1) -> (C, 1), shared MLP
            h1 = jnp.maximum(
                jnp.dot(w1, v_c1.astype(bf16), preferred_element_type=f32) + b1, 0.0)
            return jnp.dot(w2, h1.astype(bf16), preferred_element_type=f32) + b2

        ch = jnp.stack([jax.nn.sigmoid(mlp_col(avg3[b]) + mlp_col(max3[b]))
                        for b in range(B)], axis=0)       # (B, C, 1)
        out = out * ch

        # CBAM spatial attention: Conv1d(2 -> 1, k=3, pad=1) along length (lanes).
        amap = jnp.mean(out, axis=1, keepdims=True)       # (B, 1, Lp)
        mmap = jnp.max(out, axis=1, keepdims=True)        # (B, 1, Lp)
        satt = jnp.zeros((B, 1, Lp), f32) + sab_ref[lvl]
        for t in range(3):
            sft = (1 - t) % Lp
            a_t = amap if sft == 0 else pltpu.roll(amap, shift=sft, axis=2)
            m_t = mmap if sft == 0 else pltpu.roll(mmap, shift=sft, axis=2)
            satt = satt + saw_ref[lvl, 2 * t] * a_t + saw_ref[lvl, 2 * t + 1] * m_t
        out = out * jax.nn.sigmoid(satt)

        # Pointwise conv (length L_new -> L): one lane-contracting bf16 matmul,
        # then residual and Linear(C, C) (single fused channel-mix matmul).
        pw = jnp.einsum('bcn,nm->bcm', out.astype(bf16), pwwt_ref[0],
                        preferred_element_type=f32) + pwb_ref[0]
        res = pw + h
        y = chan_mix(linw_ref[0], res, linb_ref[0])
        h_new = jnp.where(valid_L, y, 0.0)
        h_ref[...] = h_new

        @pl.when(lvl == num_levels - 1)
        def _():
            out_ref[...] = h_new[:, :, :L]                # contiguous NCL store

    return kernel


# ---------------------------------------------------------------------------
# Wrapper
# ---------------------------------------------------------------------------
def ddstcn_block(x_ncl, params, *, num_levels, kernel_size=2, dilation_c=2):
    """x_ncl: (B, C, L) -- PyTorch Conv1d layout.  Returns (B, C, L)."""
    B, C, L = x_ncl.shape
    K = kernel_size
    Lp = _canvas_len(L, K, num_levels, dilation_c)
    max_pad = (K - 1) * dilation_c ** (num_levels - 1)
    assert Lp >= L + max_pad + 1, "zero-wrap invariant for lane rolls"

    kernel = make_ddstcn_kernel(B, C, L, Lp, K, num_levels, dilation_c)
    vmem = pltpu.MemorySpace.VMEM
    smem_spec = pl.BlockSpec(memory_space=pltpu.MemorySpace.SMEM)

    def whole(a):
        im = {2: (lambda l: (0, 0)), 3: (lambda l: (0, 0, 0))}[a.ndim]
        return pl.BlockSpec(a.shape, im, memory_space=vmem)

    def lvl_tiled(a):
        im = {3: (lambda l: (l, 0, 0)), 4: (lambda l: (l, 0, 0, 0))}[a.ndim]
        return pl.BlockSpec((1,) + a.shape[1:], im, memory_space=vmem)

    x = x_ncl.astype(jnp.float32)
    p = params
    in_specs = [
        smem_spec, smem_spec, smem_spec,
        whole(x), whole(p["first_w3"]), whole(p["first_b"]),
        whole(p["norm1_g"]), whole(p["norm1_b"]),
        lvl_tiled(p["bn_g"]), lvl_tiled(p["bn_b"]),
        lvl_tiled(p["dw_w"]), lvl_tiled(p["dw_b"]),
        lvl_tiled(p["ca_w1"]), lvl_tiled(p["ca_b1"]),
        lvl_tiled(p["ca_w2"]), lvl_tiled(p["ca_b2"]),
        lvl_tiled(p["pw_wt"]), lvl_tiled(p["pw_b"]),
        lvl_tiled(p["lin_w"]), lvl_tiled(p["lin_b"]),
    ]
    out_specs = pl.BlockSpec((B, C, L), lambda l: (0, 0, 0), memory_space=vmem)

    flops = int(2 * B * Lp * 3 * C * C
                + num_levels * (2 * B * C * Lp * Lp + 2 * B * Lp * C * C))
    transcendentals = int(num_levels * 3 * B * C * Lp)
    bytes_accessed = int(sum(int(v.size) * v.dtype.itemsize for v in p.values())
                         + 2 * B * C * L * 4)

    # TODO(synk): v7x 2-TC batch-parallel grid needs a cross-tile BatchNorm stats
    # reduction (per-batch statistics couple the whole batch); kept single-core.
    return pl.pallas_call(
        kernel,
        out_shape=jax.ShapeDtypeStruct((B, C, L), jnp.float32),
        grid=(num_levels,),
        in_specs=in_specs,
        out_specs=out_specs,
        scratch_shapes=[pltpu.VMEM((B, C, Lp), jnp.float32)],   # level-carried state
        compiler_params=pltpu.CompilerParams(
            dimension_semantics=("arbitrary",),
            vmem_limit_bytes=48 * 1024 * 1024),
        cost_estimate=pl.CostEstimate(flops=flops,
                                      transcendentals=transcendentals,
                                      bytes_accessed=bytes_accessed),
    )(p["meta"], p["sa_w"], p["sa_b"],
      x, p["first_w3"], p["first_b"], p["norm1_g"], p["norm1_b"],
      p["bn_g"], p["bn_b"], p["dw_w"], p["dw_b"],
      p["ca_w1"], p["ca_b1"], p["ca_w2"], p["ca_b2"],
      p["pw_wt"], p["pw_b"], p["lin_w"], p["lin_b"])


# ---------------------------------------------------------------------------
# Deterministic synthetic parameters (level-stacked, canvas-padded, bf16 MXU weights)
# ---------------------------------------------------------------------------
def init_params(key, B, C, L, num_levels, K, dilation_c):
    hidden = max(1, C // 8)                      # CBAM reduction_ratio = 8
    Lp = _canvas_len(L, K, num_levels, dilation_c)
    f32, bf16 = jnp.float32, jnp.bfloat16
    keys = jax.random.split(key, 2 + num_levels)
    kfw, kfb = jax.random.split(keys[0])

    # firstConv: torch weight (C_out, C_in, 3) fused as (C_out, 3*C_in), tap-major.
    w_first = 0.1 * jax.random.normal(kfw, (C, C, 3), f32)
    first_w3 = jnp.concatenate([w_first[:, :, t] for t in range(3)], axis=1).astype(bf16)

    p = dict(
        first_w3=first_w3,
        first_b=0.1 * jax.random.normal(kfb, (C, 1), f32),
        norm1_g=jnp.ones((C, 1), f32),
        norm1_b=jnp.zeros((C, 1), f32),
        meta=jnp.array([L + (K - 1) * dilation_c ** l for l in range(num_levels)],
                       jnp.int32),
    )
    bn_g, bn_b, dw_w, dw_b = [], [], [], []
    ca_w1, ca_b1, ca_w2, ca_b2 = [], [], [], []
    sa_w, sa_b = [], []
    pw_wt, pw_b, lin_w, lin_b = [], [], [], []
    for l in range(num_levels):
        lk = jax.random.split(keys[2 + l], 9)
        dil = dilation_c ** l
        L_new = L + (K - 1) * dil                # == features + (K-1)*2**l (dilation_c=2)
        bn_g.append(jnp.ones((C, 1), f32))
        bn_b.append(jnp.zeros((C, 1), f32))
        # depthwise conv: torch (C, 1, K) stored as (K, C, 1)
        w_dw = 0.3 * jax.random.normal(lk[0], (C, 1, K), f32)
        dw_w.append(jnp.transpose(w_dw, (2, 0, 1)))
        dw_b.append(0.1 * jax.random.normal(lk[1], (C, 1), f32))
        # CBAM channel MLP (torch orientation), bf16 for the MXU
        ca_w1.append((0.2 * jax.random.normal(lk[2], (hidden, C), f32)).astype(bf16))
        ca_b1.append(jnp.zeros((hidden, 1), f32))
        ca_w2.append((0.2 * jax.random.normal(lk[3], (C, hidden), f32)).astype(bf16))
        ca_b2.append(jnp.zeros((C, 1), f32))
        # CBAM spatial conv: torch (1, 2, 3) -> [2*t + {0:avg, 1:max}] scalars (SMEM)
        w_sa = 0.2 * jax.random.normal(lk[4], (2, 3), f32)
        sa_w.append(jnp.transpose(w_sa).reshape(6))
        sa_b.append(jnp.zeros((), f32))
        # pointwise conv: torch (L, L_new, 1) -> transposed & zero-padded to (Lp, Lp)
        w_pw = 0.1 * jax.random.normal(lk[5], (L, L_new), f32)
        b_pw = 0.1 * jax.random.normal(lk[6], (L,), f32)
        pw_wt.append(jnp.zeros((Lp, Lp), f32).at[:L_new, :L].set(w_pw.T).astype(bf16))
        pw_b.append(jnp.zeros((1, Lp), f32).at[0, :L].set(b_pw))
        # final Linear(C, C): weight ~ N(0, 0.01), torch (out, in) orientation
        lin_w.append((0.01 * jax.random.normal(lk[7], (C, C), f32)).astype(bf16))
        lin_b.append(0.05 * jax.random.normal(lk[8], (C, 1), f32))
    p.update(
        bn_g=jnp.stack(bn_g), bn_b=jnp.stack(bn_b),
        dw_w=jnp.stack(dw_w), dw_b=jnp.stack(dw_b),
        ca_w1=jnp.stack(ca_w1), ca_b1=jnp.stack(ca_b1),
        ca_w2=jnp.stack(ca_w2), ca_b2=jnp.stack(ca_b2),
        sa_w=jnp.stack(sa_w), sa_b=jnp.stack(sa_b),
        pw_wt=jnp.stack(pw_wt), pw_b=jnp.stack(pw_b),
        lin_w=jnp.stack(lin_w), lin_b=jnp.stack(lin_b),
    )
    return p


if __name__ == "__main__":
    B, C, L = 2, 16, 16                 # batch, num_inputs (channels), features (seq len)
    num_levels, kernel_size, dilation_c = 2, 2, 2

    key = jax.random.PRNGKey(0)
    kx, kp = jax.random.split(key)
    x = jax.random.normal(kx, (B, C, L), jnp.float32)          # PyTorch NCL layout
    params = init_params(kp, B, C, L, num_levels, kernel_size, dilation_c)

    out = ddstcn_block(x, params, num_levels=num_levels,
                       kernel_size=kernel_size, dilation_c=dilation_c)
    out = jax.block_until_ready(out)
    assert out.shape == (B, C, L) and out.dtype == jnp.float32
    print("KERNEL_OK")
</pallas_src>

<mosaic_0001>
module attributes {stable_mosaic.version = 11 : i64} {
  func.func @kernel(%arg0: i32, %arg1: memref<2xi32, #tpu.memory_space<smem>>, %arg2: memref<2x6xf32, #tpu.memory_space<smem>>, %arg3: memref<2xf32, #tpu.memory_space<smem>>, %arg4: memref<2x16x16xf32, #tpu.memory_space<vmem>>, %arg5: memref<16x48xbf16, #tpu.memory_space<vmem>>, %arg6: memref<16x1xf32, #tpu.memory_space<vmem>>, %arg7: memref<16x1xf32, #tpu.memory_space<vmem>>, %arg8: memref<16x1xf32, #tpu.memory_space<vmem>>, %arg9: memref<1x16x1xf32, #tpu.memory_space<vmem>>, %arg10: memref<1x16x1xf32, #tpu.memory_space<vmem>>, %arg11: memref<1x2x16x1xf32, #tpu.memory_space<vmem>>, %arg12: memref<1x16x1xf32, #tpu.memory_space<vmem>>, %arg13: memref<1x2x16xbf16, #tpu.memory_space<vmem>>, %arg14: memref<1x2x1xf32, #tpu.memory_space<vmem>>, %arg15: memref<1x16x2xbf16, #tpu.memory_space<vmem>>, %arg16: memref<1x16x1xf32, #tpu.memory_space<vmem>>, %arg17: memref<1x128x128xbf16, #tpu.memory_space<vmem>>, %arg18: memref<1x1x128xf32, #tpu.memory_space<vmem>>, %arg19: memref<1x16x16xbf16, #tpu.memory_space<vmem>>, %arg20: memref<1x16x1xf32, #tpu.memory_space<vmem>>, %arg21: memref<2x16x16xf32, #tpu.memory_space<vmem>>, %arg22: memref<2x16x128xf32, #tpu.memory_space<vmem>>) attributes {dimension_semantics = [#tpu.dimension_semantics<arbitrary>], iteration_bounds = array<i64: 2>, scalar_prefetch = 0 : i64, scratch_operands = 1 : i64, tpu.core_type = #tpu.core_type<tc>, window_params = [{transform_indices = @transform_0, window_bounds = array<i64: 2>}, {transform_indices = @transform_1, window_bounds = array<i64: 2, 6>}, {transform_indices = @transform_2, window_bounds = array<i64: 2>}, {pipeline_mode = #tpu.pipeline_mode<synchronous>, transform_indices = @transform_3, window_bounds = array<i64: 2, 16, 16>}, {pipeline_mode = #tpu.pipeline_mode<synchronous>, transform_indices = @transform_4, window_bounds = array<i64: 16, 48>}, {pipeline_mode = #tpu.pipeline_mode<synchronous>, transform_indices = @transform_5, window_bounds = array<i64: 16, 1>}, {pipeline_mode = #tpu.pipeline_mode<synchronous>, transform_indices = @transform_6, window_bounds = array<i64: 16, 1>}, {pipeline_mode = #tpu.pipeline_mode<synchronous>, transform_indices = @transform_7, window_bounds = array<i64: 16, 1>}, {transform_indices = @transform_8, window_bounds = array<i64: 1, 16, 1>}, {transform_indices = @transform_9, window_bounds = array<i64: 1, 16, 1>}, {transform_indices = @transform_10, window_bounds = array<i64: 1, 2, 16, 1>}, {transform_indices = @transform_11, window_bounds = array<i64: 1, 16, 1>}, {transform_indices = @transform_12, window_bounds = array<i64: 1, 2, 16>}, {transform_indices = @transform_13, window_bounds = array<i64: 1, 2, 1>}, {transform_indices = @transform_14, window_bounds = array<i64: 1, 16, 2>}, {transform_indices = @transform_15, window_bounds = array<i64: 1, 16, 1>}, {transform_indices = @transform_16, window_bounds = array<i64: 1, 128, 128>}, {transform_indices = @transform_17, window_bounds = array<i64: 1, 1, 128>}, {transform_indices = @transform_18, window_bounds = array<i64: 1, 16, 16>}, {transform_indices = @transform_19, window_bounds = array<i64: 1, 16, 1>}, {pipeline_mode = #tpu.pipeline_mode<synchronous>, transform_indices = @transform_20, window_bounds = array<i64: 2, 16, 16>}]} {
    %0 = tpu.iota {dimensions = array<i32: 2>} : vector<1x1x128xi32>
    %c16_i32 = arith.constant 16 : i32
    %1 = vector.broadcast %c16_i32 : i32 to vector<1x1x128xi32>
    %2 = arith.cmpi slt, %0, %1 : vector<1x1x128xi32>
    %c0_i32 = arith.constant 0 : i32
    %3 = arith.cmpi eq, %arg0, %c0_i32 : i32
    %4 = arith.extui %3 : i1 to i32
    %c0_i32_0 = arith.constant 0 : i32
    %5 = arith.cmpi ne, %4, %c0_i32_0 : i32
    scf.if %5 {
      %cst_89 = arith.constant 0.000000e+00 : f32
      %258 = vector.broadcast %cst_89 : f32 to vector<2x16x128xf32>
      %c0_90 = arith.constant 0 : index
      %c0_91 = arith.constant 0 : index
      %c0_92 = arith.constant 0 : index
      %259 = vector.load %arg22[%c0_90, %c0_91, %c0_92] : memref<2x16x128xf32, #tpu.memory_space<vmem>>, vector<2x16x128xf32>
      tpu.vector_store %arg22[%c0_90, %c0_91, %c0_92], %258 {strides = array<i32>} : memref<2x16x128xf32, #tpu.memory_space<vmem>>, vector<2x16x128xf32>,
      %c0_93 = arith.constant 0 : index
      %c0_94 = arith.constant 0 : index
      %c0_95 = arith.constant 0 : index
      %260 = vector.load %arg4[%c0_93, %c0_94, %c0_95] : memref<2x16x16xf32, #tpu.memory_space<vmem>>, vector<2x16x16xf32>
      %c0_96 = arith.constant 0 : index
      %c0_97 = arith.constant 0 : index
      %c0_98 = arith.constant 0 : index
      %261 = vector.load %arg22[%c0_96, %c0_97, %c0_98] : memref<2x16x128xf32, #tpu.memory_space<vmem>>, vector<2x16x16xf32>
      tpu.vector_store %arg22[%c0_96, %c0_97, %c0_98], %260 {strides = array<i32>} : memref<2x16x128xf32, #tpu.memory_space<vmem>>, vector<2x16x16xf32>,
      %c0_99 = arith.constant 0 : index
      %c0_100 = arith.constant 0 : index
      %c0_101 = arith.constant 0 : index
      %262 = vector.load %arg22[%c0_99, %c0_100, %c0_101] : memref<2x16x128xf32, #tpu.memory_space<vmem>>, vector<2x16x128xf32>
      %c1_i32_102 = arith.constant 1 : i32
      %263 = tpu.dynamic_rotate %262 by %c1_i32_102 dim 2 : vector<2x16x128xf32>, i32 -> vector<2x16x128xf32>
      %c127_i32_103 = arith.constant 127 : i32
      %264 = tpu.dynamic_rotate %262 by %c127_i32_103 dim 2 : vector<2x16x128xf32>, i32 -> vector<2x16x128xf32>
      %265 = tpu.concatenate %263, %262, %264 in 1 : vector<2x16x128xf32>, vector<2x16x128xf32>, vector<2x16x128xf32> -> vector<2x48x128xf32>
      %c0_104 = arith.constant 0 : index
      %c0_105 = arith.constant 0 : index
      %266 = vector.load %arg5[%c0_104, %c0_105] : memref<16x48xbf16, #tpu.memory_space<vmem>>, vector<16x48xbf16>
      %c0_106 = arith.constant 0 : index
      %c0_107 = arith.constant 0 : index
      %267 = vector.load %arg6[%c0_106, %c0_107] : memref<16x1xf32, #tpu.memory_space<vmem>>, vector<16x1xf32>
      %268 = vector.extract_strided_slice %265 {offsets = [0, 0, 0], sizes = [1, 48, 128], strides = [1, 1, 1]} : vector<2x48x128xf32> to vector<1x48x128xf32>
      %269 = vector.shape_cast %268 : vector<1x48x128xf32> to vector<48x128xf32>
      %270 = vector.extract_strided_slice %265 {offsets = [1, 0, 0], sizes = [1, 48, 128], strides = [1, 1, 1]} : vector<2x48x128xf32> to vector<1x48x128xf32>
      %271 = vector.shape_cast %270 : vector<1x48x128xf32> to vector<48x128xf32>
      %272 = tpu.concatenate %269, %271 in 1 : vector<48x128xf32>, vector<48x128xf32> -> vector<48x256xf32>
      %273 = arith.truncf %272 : vector<48x256xf32> to vector<48x256xbf16>
      %cst_108 = arith.constant dense<0.000000e+00> : vector<16x256xf32>
      %274 = tpu.matmul %266, %273, %cst_108 {dimension_numbers = #tpu.dot_dimension_numbers<[1], [0], [0], [1], [0, 0, 1, 1], [], []>} : vector<16x48xbf16>, vector<48x256xbf16>, vector<16x256xf32> -> vector<16x256xf32>
      %275 = vector.broadcast %267 : vector<16x1xf32> to vector<16x256xf32>
      %276 = arith.addf %274, %275 : vector<16x256xf32>
      %277 = vector.extract_strided_slice %276 {offsets = [0, 0], sizes = [16, 128], strides = [1, 1]} : vector<16x256xf32> to vector<16x128xf32>
      %278 = vector.extract_strided_slice %276 {offsets = [0, 128], sizes = [16, 128], strides = [1, 1]} : vector<16x256xf32> to vector<16x128xf32>
      %279 = vector.shape_cast %277 : vector<16x128xf32> to vector<1x16x128xf32>
      %280 = vector.shape_cast %278 : vector<16x128xf32> to vector<1x16x128xf32>
      %281 = tpu.concatenate %279, %280 in 0 : vector<1x16x128xf32>, vector<1x16x128xf32> -> vector<2x16x128xf32>
      %cst_109 = arith.constant 0.000000e+00 : f32
      %282 = vector.shape_cast %2 : vector<1x1x128xi1> to vector<1x1x128xi1>
      %283 = vector.broadcast %282 : vector<1x1x128xi1> to vector<2x16x128xi1>
      %284 = vector.broadcast %cst_109 : f32 to vector<2x16x128xf32>
      %285 = arith.select %283, %281, %284 : vector<2x16x128xi1>, vector<2x16x128xf32>
      %c0_110 = arith.constant 0 : index
      %c0_111 = arith.constant 0 : index
      %286 = vector.load %arg7[%c0_110, %c0_111] : memref<16x1xf32, #tpu.memory_space<vmem>>, vector<16x1xf32>
      %c0_112 = arith.constant 0 : index
      %c0_113 = arith.constant 0 : index
      %287 = vector.load %arg8[%c0_112, %c0_113] : memref<16x1xf32, #tpu.memory_space<vmem>>, vector<16x1xf32>
      %cst_114 = arith.constant dense<0.000000e+00> : vector<16xf32>
      %288 = vector.multi_reduction <add>, %285, %cst_114 [0, 2] : vector<2x16x128xf32> to vector<16xf32>
      %289 = vector.shape_cast %288 : vector<16xf32> to vector<1x16x1xf32>
      %cst_115 = arith.constant 3.200000e+01 : f32
      %290 = vector.broadcast %cst_115 : f32 to vector<1x16x1xf32>
      %291 = arith.divf %289, %290 : vector<1x16x1xf32>
      %292 = vector.broadcast %291 : vector<1x16x1xf32> to vector<2x16x128xf32>
      %293 = arith.subf %285, %292 : vector<2x16x128xf32>
      %cst_116 = arith.constant 0.000000e+00 : f32
      %294 = vector.shape_cast %2 : vector<1x1x128xi1> to vector<1x1x128xi1>
      %295 = vector.broadcast %294 : vector<1x1x128xi1> to vector<2x16x128xi1>
      %296 = vector.broadcast %cst_116 : f32 to vector<2x16x128xf32>
      %297 = arith.select %295, %293, %296 : vector<2x16x128xi1>, vector<2x16x128xf32>
      %298 = arith.mulf %297, %297 : vector<2x16x128xf32>
      %cst_117 = arith.constant dense<0.000000e+00> : vector<16xf32>
      %299 = vector.multi_reduction <add>, %298, %cst_117 [0, 2] : vector<2x16x128xf32> to vector<16xf32>
      %300 = vector.shape_cast %299 : vector<16xf32> to vector<1x16x1xf32>
      %cst_118 = arith.constant 3.200000e+01 : f32
      %301 = vector.broadcast %cst_118 : f32 to vector<1x16x1xf32>
      %302 = arith.divf %300, %301 : vector<1x16x1xf32>
      %cst_119 = arith.constant 9.99999974E-6 : f32
      %303 = vector.broadcast %cst_119 : f32 to vector<1x16x1xf32>
      %304 = arith.addf %302, %303 : vector<1x16x1xf32>
      %305 = math.rsqrt %304 : vector<1x16x1xf32>
      %306 = vector.broadcast %305 : vector<1x16x1xf32> to vector<2x16x128xf32>
      %307 = arith.mulf %297, %306 : vector<2x16x128xf32>
      %308 = vector.shape_cast %286 : vector<16x1xf32> to vector<1x16x1xf32>
      %309 = vector.broadcast %308 : vector<1x16x1xf32> to vector<2x16x128xf32>
      %310 = arith.mulf %307, %309 : vector<2x16x128xf32>
      %cst_120 = arith.constant 0.000000e+00 : f32
      %311 = vector.shape_cast %2 : vector<1x1x128xi1> to vector<1x1x128xi1>
      %312 = vector.broadcast %311 : vector<1x1x128xi1> to vector<1x16x128xi1>
      %313 = vector.shape_cast %287 : vector<16x1xf32> to vector<1x16x1xf32>
      %314 = vector.broadcast %313 : vector<1x16x1xf32> to vector<1x16x128xf32>
      %315 = vector.broadcast %cst_120 : f32 to vector<1x16x128xf32>
      %316 = arith.select %312, %314, %315 : vector<1x16x128xi1>, vector<1x16x128xf32>
      %317 = vector.broadcast %316 : vector<1x16x128xf32> to vector<2x16x128xf32>
      %318 = arith.addf %310, %317 : vector<2x16x128xf32>
      %c0_121 = arith.constant 0 : index
      %c0_122 = arith.constant 0 : index
      %c0_123 = arith.constant 0 : index
      %319 = vector.load %arg22[%c0_121, %c0_122, %c0_123] : memref<2x16x128xf32, #tpu.memory_space<vmem>>, vector<2x16x128xf32>
      tpu.vector_store %arg22[%c0_121, %c0_122, %c0_123], %318 {strides = array<i32>} : memref<2x16x128xf32, #tpu.memory_space<vmem>>, vector<2x16x128xf32>,
    } else {
    }
    %c0 = arith.constant 0 : index
    %c0_1 = arith.constant 0 : index
    %c0_2 = arith.constant 0 : index
    %6 = vector.load %arg22[%c0, %c0_1, %c0_2] : memref<2x16x128xf32, #tpu.memory_space<vmem>>, vector<2x16x128xf32>
    %7 = arith.index_cast %arg0 : i32 to index
    %8 = memref.load %arg1[%7] : memref<2xi32, #tpu.memory_space<smem>>
    %9 = arith.sitofp %8 : i32 to f32
    %10 = vector.broadcast %8 : i32 to vector<1x1x128xi32>
    %11 = arith.cmpi slt, %0, %10 : vector<1x1x128xi32>
    %c0_3 = arith.constant 0 : index
    %c0_4 = arith.constant 0 : index
    %c0_5 = arith.constant 0 : index
    %12 = vector.load %arg9[%c0_3, %c0_4, %c0_5] : memref<1x16x1xf32, #tpu.memory_space<vmem>>, vector<1x16x1xf32>
    %13 = vector.shape_cast %12 : vector<1x16x1xf32> to vector<16x1xf32>
    %c0_6 = arith.constant 0 : index
    %c0_7 = arith.constant 0 : index
    %c0_8 = arith.constant 0 : index
    %14 = vector.load %arg10[%c0_6, %c0_7, %c0_8] : memref<1x16x1xf32, #tpu.memory_space<vmem>>, vector<1x16x1xf32>
    %15 = vector.shape_cast %14 : vector<1x16x1xf32> to vector<16x1xf32>
    %cst = arith.constant dense<0.000000e+00> : vector<16xf32>
    %16 = vector.multi_reduction <add>, %6, %cst [0, 2] : vector<2x16x128xf32> to vector<16xf32>
    %17 = vector.shape_cast %16 : vector<16xf32> to vector<1x16x1xf32>
    %cst_9 = arith.constant 3.200000e+01 : f32
    %18 = vector.broadcast %cst_9 : f32 to vector<1x16x1xf32>
    %19 = arith.divf %17, %18 : vector<1x16x1xf32>
    %20 = vector.broadcast %19 : vector<1x16x1xf32> to vector<2x16x128xf32>
    %21 = arith.subf %6, %20 : vector<2x16x128xf32>
    %cst_10 = arith.constant 0.000000e+00 : f32
    %22 = vector.shape_cast %2 : vector<1x1x128xi1> to vector<1x1x128xi1>
    %23 = vector.broadcast %22 : vector<1x1x128xi1> to vector<2x16x128xi1>
    %24 = vector.broadcast %cst_10 : f32 to vector<2x16x128xf32>
    %25 = arith.select %23, %21, %24 : vector<2x16x128xi1>, vector<2x16x128xf32>
    %26 = arith.mulf %25, %25 : vector<2x16x128xf32>
    %cst_11 = arith.constant dense<0.000000e+00> : vector<16xf32>
    %27 = vector.multi_reduction <add>, %26, %cst_11 [0, 2] : vector<2x16x128xf32> to vector<16xf32>
    %28 = vector.shape_cast %27 : vector<16xf32> to vector<1x16x1xf32>
    %cst_12 = arith.constant 3.200000e+01 : f32
    %29 = vector.broadcast %cst_12 : f32 to vector<1x16x1xf32>
    %30 = arith.divf %28, %29 : vector<1x16x1xf32>
    %cst_13 = arith.constant 9.99999974E-6 : f32
    %31 = vector.broadcast %cst_13 : f32 to vector<1x16x1xf32>
    %32 = arith.addf %30, %31 : vector<1x16x1xf32>
    %33 = math.rsqrt %32 : vector<1x16x1xf32>
    %34 = vector.broadcast %33 : vector<1x16x1xf32> to vector<2x16x128xf32>
    %35 = arith.mulf %25, %34 : vector<2x16x128xf32>
    %36 = vector.shape_cast %13 : vector<16x1xf32> to vector<1x16x1xf32>
    %37 = vector.broadcast %36 : vector<1x16x1xf32> to vector<2x16x128xf32>
    %38 = arith.mulf %35, %37 : vector<2x16x128xf32>
    %cst_14 = arith.constant 0.000000e+00 : f32
    %39 = vector.shape_cast %2 : vector<1x1x128xi1> to vector<1x1x128xi1>
    %40 = vector.broadcast %39 : vector<1x1x128xi1> to vector<1x16x128xi1>
    %41 = vector.shape_cast %15 : vector<16x1xf32> to vector<1x16x1xf32>
    %42 = vector.broadcast %41 : vector<1x16x1xf32> to vector<1x16x128xf32>
    %43 = vector.broadcast %cst_14 : f32 to vector<1x16x128xf32>
    %44 = arith.select %40, %42, %43 : vector<1x16x128xi1>, vector<1x16x128xf32>
    %45 = vector.broadcast %44 : vector<1x16x128xf32> to vector<2x16x128xf32>
    %46 = arith.addf %38, %45 : vector<2x16x128xf32>
    %c0_15 = arith.constant 0 : index
    %c0_16 = arith.constant 0 : index
    %c0_17 = arith.constant 0 : index
    %c0_18 = arith.constant 0 : index
    %47 = vector.load %arg11[%c0_15, %c0_16, %c0_17, %c0_18] : memref<1x2x16x1xf32, #tpu.memory_space<vmem>>, vector<1x2x16x1xf32>
    %48 = vector.shape_cast %47 : vector<1x2x16x1xf32> to vector<2x16x1xf32>
    %49 = vector.extract_strided_slice %48 {offsets = [1, 0, 0], sizes = [1, 16, 1], strides = [1, 1, 1]} : vector<2x16x1xf32> to vector<1x16x1xf32>
    %50 = vector.shape_cast %49 : vector<1x16x1xf32> to vector<16x1xf32>
    %51 = vector.shape_cast %50 : vector<16x1xf32> to vector<1x16x1xf32>
    %52 = vector.broadcast %51 : vector<1x16x1xf32> to vector<2x16x128xf32>
    %53 = arith.mulf %46, %52 : vector<2x16x128xf32>
    %cst_19 = arith.constant 0.000000e+00 : f32
    %54 = vector.broadcast %cst_19 : f32 to vector<2x16x128xf32>
    %c0_i32_20 = arith.constant 0 : i32
    %55 = arith.cmpi eq, %arg0, %c0_i32_20 : i32
    %56 = arith.extui %55 : i1 to i32
    %57 = arith.sitofp %56 : i32 to f32
    %c1_i32 = arith.constant 1 : i32
    %58 = tpu.dynamic_rotate %46 by %c1_i32 dim 2 : vector<2x16x128xf32>, i32 -> vector<2x16x128xf32>
    %59 = vector.broadcast %57 : f32 to vector<2x16x128xf32>
    %60 = arith.mulf %59, %58 : vector<2x16x128xf32>
    %61 = arith.addf %54, %60 : vector<2x16x128xf32>
    %c1_i32_21 = arith.constant 1 : i32
    %62 = arith.cmpi eq, %arg0, %c1_i32_21 : i32
    %63 = arith.extui %62 : i1 to i32
    %64 = arith.sitofp %63 : i32 to f32
    %c2_i32 = arith.constant 2 : i32
    %65 = tpu.dynamic_rotate %46 by %c2_i32 dim 2 : vector<2x16x128xf32>, i32 -> vector<2x16x128xf32>
    %66 = vector.broadcast %64 : f32 to vector<2x16x128xf32>
    %67 = arith.mulf %66, %65 : vector<2x16x128xf32>
    %68 = arith.addf %61, %67 : vector<2x16x128xf32>
    %69 = vector.extract_strided_slice %48 {offsets = [0, 0, 0], sizes = [1, 16, 1], strides = [1, 1, 1]} : vector<2x16x1xf32> to vector<1x16x1xf32>
    %70 = vector.shape_cast %69 : vector<1x16x1xf32> to vector<16x1xf32>
    %71 = vector.shape_cast %70 : vector<16x1xf32> to vector<1x16x1xf32>
    %72 = vector.broadcast %71 : vector<1x16x1xf32> to vector<2x16x128xf32>
    %73 = arith.mulf %68, %72 : vector<2x16x128xf32>
    %74 = arith.addf %53, %73 : vector<2x16x128xf32>
    %c0_22 = arith.constant 0 : index
    %c0_23 = arith.constant 0 : index
    %c0_24 = arith.constant 0 : index
    %75 = vector.load %arg12[%c0_22, %c0_23, %c0_24] : memref<1x16x1xf32, #tpu.memory_space<vmem>>, vector<1x16x1xf32>
    %76 = vector.shape_cast %75 : vector<1x16x1xf32> to vector<16x1xf32>
    %77 = vector.shape_cast %76 : vector<16x1xf32> to vector<1x16x1xf32>
    %78 = vector.broadcast %77 : vector<1x16x1xf32> to vector<2x16x128xf32>
    %79 = arith.addf %74, %78 : vector<2x16x128xf32>
    %cst_25 = arith.constant 0.000000e+00 : f32
    %80 = vector.broadcast %cst_25 : f32 to vector<2x16x128xf32>
    %81 = arith.cmpf ogt, %79, %80 : vector<2x16x128xf32>
    %82 = math.exp %79 : vector<2x16x128xf32>
    %cst_26 = arith.constant 1.000000e+00 : f32
    %83 = vector.broadcast %cst_26 : f32 to vector<2x16x128xf32>
    %84 = arith.subf %82, %83 : vector<2x16x128xf32>
    %cst_27 = arith.constant 1.67326319 : f32
    %85 = vector.broadcast %cst_27 : f32 to vector<2x16x128xf32>
    %86 = arith.mulf %85, %84 : vector<2x16x128xf32>
    %87 = arith.select %81, %79, %86 : vector<2x16x128xi1>, vector<2x16x128xf32>
    %cst_28 = arith.constant 1.05070102 : f32
    %88 = vector.broadcast %cst_28 : f32 to vector<2x16x128xf32>
    %89 = arith.mulf %88, %87 : vector<2x16x128xf32>
    %cst_29 = arith.constant 0.000000e+00 : f32
    %90 = vector.shape_cast %11 : vector<1x1x128xi1> to vector<1x1x128xi1>
    %91 = vector.broadcast %90 : vector<1x1x128xi1> to vector<2x16x128xi1>
    %92 = vector.broadcast %cst_29 : f32 to vector<2x16x128xf32>
    %93 = arith.select %91, %89, %92 : vector<2x16x128xi1>, vector<2x16x128xf32>
    %cst_30 = arith.constant 1.000000e+00 : f32
    %94 = arith.divf %cst_30, %9 : f32
    %cst_31 = arith.constant dense<0.000000e+00> : vector<2x16xf32>
    %95 = vector.multi_reduction <add>, %93, %cst_31 [2] : vector<2x16x128xf32> to vector<2x16xf32>
    %96 = vector.shape_cast %95 : vector<2x16xf32> to vector<2x16x1xf32>
    %97 = vector.broadcast %94 : f32 to vector<2x16x1xf32>
    %98 = arith.mulf %96, %97 : vector<2x16x1xf32>
    %cst_32 = arith.constant -3.40282347E+38 : f32
    %99 = vector.shape_cast %11 : vector<1x1x128xi1> to vector<1x1x128xi1>
    %100 = vector.broadcast %99 : vector<1x1x128xi1> to vector<2x16x128xi1>
    %101 = vector.broadcast %cst_32 : f32 to vector<2x16x128xf32>
    %102 = arith.select %100, %93, %101 : vector<2x16x128xi1>, vector<2x16x128xf32>
    %cst_33 = arith.constant dense<0xFF800000> : vector<2x16xf32>
    %103 = vector.multi_reduction <maximumf>, %102, %cst_33 [2] : vector<2x16x128xf32> to vector<2x16xf32>
    %104 = vector.shape_cast %103 : vector<2x16xf32> to vector<2x16x1xf32>
    %c0_34 = arith.constant 0 : index
    %c0_35 = arith.constant 0 : index
    %c0_36 = arith.constant 0 : index
    %105 = vector.load %arg13[%c0_34, %c0_35, %c0_36] : memref<1x2x16xbf16, #tpu.memory_space<vmem>>, vector<1x2x16xbf16>
    %106 = vector.shape_cast %105 : vector<1x2x16xbf16> to vector<2x16xbf16>
    %c0_37 = arith.constant 0 : index
    %c0_38 = arith.constant 0 : index
    %c0_39 = arith.constant 0 : index
    %107 = vector.load %arg14[%c0_37, %c0_38, %c0_39] : memref<1x2x1xf32, #tpu.memory_space<vmem>>, vector<1x2x1xf32>
    %108 = vector.shape_cast %107 : vector<1x2x1xf32> to vector<2x1xf32>
    %c0_40 = arith.constant 0 : index
    %c0_41 = arith.constant 0 : index
    %c0_42 = arith.constant 0 : index
    %109 = vector.load %arg15[%c0_40, %c0_41, %c0_42] : memref<1x16x2xbf16, #tpu.memory_space<vmem>>, vector<1x16x2xbf16>
    %110 = vector.shape_cast %109 : vector<1x16x2xbf16> to vector<16x2xbf16>
    %c0_43 = arith.constant 0 : index
    %c0_44 = arith.constant 0 : index
    %c0_45 = arith.constant 0 : index
    %111 = vector.load %arg16[%c0_43, %c0_44, %c0_45] : memref<1x16x1xf32, #tpu.memory_space<vmem>>, vector<1x16x1xf32>
    %112 = vector.shape_cast %111 : vector<1x16x1xf32> to vector<16x1xf32>
    %113 = vector.extract_strided_slice %98 {offsets = [0, 0, 0], sizes = [1, 16, 1], strides = [1, 1, 1]} : vector<2x16x1xf32> to vector<1x16x1xf32>
    %114 = vector.shape_cast %113 : vector<1x16x1xf32> to vector<16x1xf32>
    %115 = arith.truncf %114 : vector<16x1xf32> to vector<16x1xbf16>
    %cst_46 = arith.constant dense<0.000000e+00> : vector<2x1xf32>
    %116 = tpu.matmul %106, %115, %cst_46 {dimension_numbers = #tpu.dot_dimension_numbers<[1], [0], [0], [1], [0, 0, 1, 1], [], []>} : vector<2x16xbf16>, vector<16x1xbf16>, vector<2x1xf32> -> vector<2x1xf32>
    %117 = arith.addf %116, %108 : vector<2x1xf32>
    %cst_47 = arith.constant 0.000000e+00 : f32
    %118 = vector.broadcast %cst_47 : f32 to vector<2x1xf32>
    %119 = arith.maximumf %117, %118 : vector<2x1xf32>
    %120 = arith.truncf %119 : vector<2x1xf32> to vector<2x1xbf16>
    %cst_48 = arith.constant dense<0.000000e+00> : vector<16x1xf32>
    %121 = tpu.matmul %110, %120, %cst_48 {dimension_numbers = #tpu.dot_dimension_numbers<[1], [0], [0], [1], [0, 0, 1, 1], [], []>} : vector<16x2xbf16>, vector<2x1xbf16>, vector<16x1xf32> -> vector<16x1xf32>
    %122 = arith.addf %121, %112 : vector<16x1xf32>
    %123 = vector.extract_strided_slice %104 {offsets = [0, 0, 0], sizes = [1, 16, 1], strides = [1, 1, 1]} : vector<2x16x1xf32> to vector<1x16x1xf32>
    %124 = vector.shape_cast %123 : vector<1x16x1xf32> to vector<16x1xf32>
    %125 = arith.truncf %124 : vector<16x1xf32> to vector<16x1xbf16>
    %cst_49 = arith.constant dense<0.000000e+00> : vector<2x1xf32>
    %126 = tpu.matmul %106, %125, %cst_49 {dimension_numbers = #tpu.dot_dimension_numbers<[1], [0], [0], [1], [0, 0, 1, 1], [], []>} : vector<2x16xbf16>, vector<16x1xbf16>, vector<2x1xf32> -> vector<2x1xf32>
    %127 = arith.addf %126, %108 : vector<2x1xf32>
    %cst_50 = arith.constant 0.000000e+00 : f32
    %128 = vector.broadcast %cst_50 : f32 to vector<2x1xf32>
    %129 = arith.maximumf %127, %128 : vector<2x1xf32>
    %130 = arith.truncf %129 : vector<2x1xf32> to vector<2x1xbf16>
    %cst_51 = arith.constant dense<0.000000e+00> : vector<16x1xf32>
    %131 = tpu.matmul %110, %130, %cst_51 {dimension_numbers = #tpu.dot_dimension_numbers<[1], [0], [0], [1], [0, 0, 1, 1], [], []>} : vector<16x2xbf16>, vector<2x1xbf16>, vector<16x1xf32> -> vector<16x1xf32>
    %132 = arith.addf %131, %112 : vector<16x1xf32>
    %133 = arith.addf %122, %132 : vector<16x1xf32>
    %134 = arith.negf %133 : vector<16x1xf32>
    %135 = math.exp %134 : vector<16x1xf32>
    %cst_52 = arith.constant 1.000000e+00 : f32
    %136 = vector.broadcast %cst_52 : f32 to vector<16x1xf32>
    %137 = arith.addf %136, %135 : vector<16x1xf32>
    %138 = arith.divf %136, %137 : vector<16x1xf32>
    %139 = vector.extract_strided_slice %98 {offsets = [1, 0, 0], sizes = [1, 16, 1], strides = [1, 1, 1]} : vector<2x16x1xf32> to vector<1x16x1xf32>
    %140 = vector.shape_cast %139 : vector<1x16x1xf32> to vector<16x1xf32>
    %141 = arith.truncf %140 : vector<16x1xf32> to vector<16x1xbf16>
    %cst_53 = arith.constant dense<0.000000e+00> : vector<2x1xf32>
    %142 = tpu.matmul %106, %141, %cst_53 {dimension_numbers = #tpu.dot_dimension_numbers<[1], [0], [0], [1], [0, 0, 1, 1], [], []>} : vector<2x16xbf16>, vector<16x1xbf16>, vector<2x1xf32> -> vector<2x1xf32>
    %143 = arith.addf %142, %108 : vector<2x1xf32>
    %cst_54 = arith.constant 0.000000e+00 : f32
    %144 = vector.broadcast %cst_54 : f32 to vector<2x1xf32>
    %145 = arith.maximumf %143, %144 : vector<2x1xf32>
    %146 = arith.truncf %145 : vector<2x1xf32> to vector<2x1xbf16>
    %cst_55 = arith.constant dense<0.000000e+00> : vector<16x1xf32>
    %147 = tpu.matmul %110, %146, %cst_55 {dimension_numbers = #tpu.dot_dimension_numbers<[1], [0], [0], [1], [0, 0, 1, 1], [], []>} : vector<16x2xbf16>, vector<2x1xbf16>, vector<16x1xf32> -> vector<16x1xf32>
    %148 = arith.addf %147, %112 : vector<16x1xf32>
    %149 = vector.extract_strided_slice %104 {offsets = [1, 0, 0], sizes = [1, 16, 1], strides = [1, 1, 1]} : vector<2x16x1xf32> to vector<1x16x1xf32>
    %150 = vector.shape_cast %149 : vector<1x16x1xf32> to vector<16x1xf32>
    %151 = arith.truncf %150 : vector<16x1xf32> to vector<16x1xbf16>
    %cst_56 = arith.constant dense<0.000000e+00> : vector<2x1xf32>
    %152 = tpu.matmul %106, %151, %cst_56 {dimension_numbers = #tpu.dot_dimension_numbers<[1], [0], [0], [1], [0, 0, 1, 1], [], []>} : vector<2x16xbf16>, vector<16x1xbf16>, vector<2x1xf32> -> vector<2x1xf32>
    %153 = arith.addf %152, %108 : vector<2x1xf32>
    %cst_57 = arith.constant 0.000000e+00 : f32
    %154 = vector.broadcast %cst_57 : f32 to vector<2x1xf32>
    %155 = arith.maximumf %153, %154 : vector<2x1xf32>
    %156 = arith.truncf %155 : vector<2x1xf32> to vector<2x1xbf16>
    %cst_58 = arith.constant dense<0.000000e+00> : vector<16x1xf32>
    %157 = tpu.matmul %110, %156, %cst_58 {dimension_numbers = #tpu.dot_dimension_numbers<[1], [0], [0], [1], [0, 0, 1, 1], [], []>} : vector<16x2xbf16>, vector<2x1xbf16>, vector<16x1xf32> -> vector<16x1xf32>
    %158 = arith.addf %157, %112 : vector<16x1xf32>
    %159 = arith.addf %148, %158 : vector<16x1xf32>
    %160 = arith.negf %159 : vector<16x1xf32>
    %161 = math.exp %160 : vector<16x1xf32>
    %cst_59 = arith.constant 1.000000e+00 : f32
    %162 = vector.broadcast %cst_59 : f32 to vector<16x1xf32>
    %163 = arith.addf %162, %161 : vector<16x1xf32>
    %164 = arith.divf %162, %163 : vector<16x1xf32>
    %165 = vector.shape_cast %138 : vector<16x1xf32> to vector<1x16x1xf32>
    %166 = vector.shape_cast %164 : vector<16x1xf32> to vector<1x16x1xf32>
    %167 = tpu.concatenate %165, %166 in 0 : vector<1x16x1xf32>, vector<1x16x1xf32> -> vector<2x16x1xf32>
    %168 = vector.broadcast %167 : vector<2x16x1xf32> to vector<2x16x128xf32>
    %169 = arith.mulf %93, %168 : vector<2x16x128xf32>
    %cst_60 = arith.constant dense<0.000000e+00> : vector<2x128xf32>
    %170 = vector.multi_reduction <add>, %169, %cst_60 [1] : vector<2x16x128xf32> to vector<2x128xf32>
    %171 = vector.shape_cast %170 : vector<2x128xf32> to vector<2x1x128xf32>
    %cst_61 = arith.constant 1.600000e+01 : f32
    %172 = vector.broadcast %cst_61 : f32 to vector<2x1x128xf32>
    %173 = arith.divf %171, %172 : vector<2x1x128xf32>
    %cst_62 = arith.constant dense<0xFF800000> : vector<2x128xf32>
    %174 = vector.multi_reduction <maximumf>, %169, %cst_62 [1] : vector<2x16x128xf32> to vector<2x128xf32>
    %175 = vector.shape_cast %174 : vector<2x128xf32> to vector<2x1x128xf32>
    %cst_63 = arith.constant 0.000000e+00 : f32
    %176 = vector.broadcast %cst_63 : f32 to vector<2x1x128xf32>
    %177 = arith.index_cast %arg0 : i32 to index
    %178 = memref.load %arg3[%177] : memref<2xf32, #tpu.memory_space<smem>>
    %179 = vector.broadcast %178 : f32 to vector<2x1x128xf32>
    %180 = arith.addf %176, %179 : vector<2x1x128xf32>
    %c1_i32_64 = arith.constant 1 : i32
    %181 = tpu.dynamic_rotate %173 by %c1_i32_64 dim 2 : vector<2x1x128xf32>, i32 -> vector<2x1x128xf32>
    %c1_i32_65 = arith.constant 1 : i32
    %182 = tpu.dynamic_rotate %175 by %c1_i32_65 dim 2 : vector<2x1x128xf32>, i32 -> vector<2x1x128xf32>
    %183 = arith.index_cast %arg0 : i32 to index
    %c0_66 = arith.constant 0 : index
    %184 = memref.load %arg2[%183, %c0_66] : memref<2x6xf32, #tpu.memory_space<smem>>
    %185 = vector.broadcast %184 : f32 to vector<2x1x128xf32>
    %186 = arith.mulf %185, %181 : vector<2x1x128xf32>
    %187 = arith.addf %180, %186 : vector<2x1x128xf32>
    %188 = arith.index_cast %arg0 : i32 to index
    %c1 = arith.constant 1 : index
    %189 = memref.load %arg2[%188, %c1] : memref<2x6xf32, #tpu.memory_space<smem>>
    %190 = vector.broadcast %189 : f32 to vector<2x1x128xf32>
    %191 = arith.mulf %190, %182 : vector<2x1x128xf32>
    %192 = arith.addf %187, %191 : vector<2x1x128xf32>
    %193 = arith.index_cast %arg0 : i32 to index
    %c2 = arith.constant 2 : index
    %194 = memref.load %arg2[%193, %c2] : memref<2x6xf32, #tpu.memory_space<smem>>
    %195 = vector.broadcast %194 : f32 to vector<2x1x128xf32>
    %196 = arith.mulf %195, %173 : vector<2x1x128xf32>
    %197 = arith.addf %192, %196 : vector<2x1x128xf32>
    %198 = arith.index_cast %arg0 : i32 to index
    %c3 = arith.constant 3 : index
    %199 = memref.load %arg2[%198, %c3] : memref<2x6xf32, #tpu.memory_space<smem>>
    %200 = vector.broadcast %199 : f32 to vector<2x1x128xf32>
    %201 = arith.mulf %200, %175 : vector<2x1x128xf32>
    %202 = arith.addf %197, %201 : vector<2x1x128xf32>
    %c127_i32 = arith.constant 127 : i32
    %203 = tpu.dynamic_rotate %173 by %c127_i32 dim 2 : vector<2x1x128xf32>, i32 -> vector<2x1x128xf32>
    %c127_i32_67 = arith.constant 127 : i32
    %204 = tpu.dynamic_rotate %175 by %c127_i32_67 dim 2 : vector<2x1x128xf32>, i32 -> vector<2x1x128xf32>
    %205 = arith.index_cast %arg0 : i32 to index
    %c4 = arith.constant 4 : index
    %206 = memref.load %arg2[%205, %c4] : memref<2x6xf32, #tpu.memory_space<smem>>
    %207 = vector.broadcast %206 : f32 to vector<2x1x128xf32>
    %208 = arith.mulf %207, %203 : vector<2x1x128xf32>
    %209 = arith.addf %202, %208 : vector<2x1x128xf32>
    %210 = arith.index_cast %arg0 : i32 to index
    %c5 = arith.constant 5 : index
    %211 = memref.load %arg2[%210, %c5] : memref<2x6xf32, #tpu.memory_space<smem>>
    %212 = vector.broadcast %211 : f32 to vector<2x1x128xf32>
    %213 = arith.mulf %212, %204 : vector<2x1x128xf32>
    %214 = arith.addf %209, %213 : vector<2x1x128xf32>
    %215 = arith.negf %214 : vector<2x1x128xf32>
    %216 = math.exp %215 : vector<2x1x128xf32>
    %cst_68 = arith.constant 1.000000e+00 : f32
    %217 = vector.broadcast %cst_68 : f32 to vector<2x1x128xf32>
    %218 = arith.addf %217, %216 : vector<2x1x128xf32>
    %219 = arith.divf %217, %218 : vector<2x1x128xf32>
    %220 = vector.broadcast %219 : vector<2x1x128xf32> to vector<2x16x128xf32>
    %221 = arith.mulf %169, %220 : vector<2x16x128xf32>
    %222 = arith.truncf %221 : vector<2x16x128xf32> to vector<2x16x128xbf16>
    %c0_69 = arith.constant 0 : index
    %c0_70 = arith.constant 0 : index
    %c0_71 = arith.constant 0 : index
    %223 = vector.load %arg17[%c0_69, %c0_70, %c0_71] : memref<1x128x128xbf16, #tpu.memory_space<vmem>>, vector<1x128x128xbf16>
    %224 = vector.shape_cast %223 : vector<1x128x128xbf16> to vector<128x128xbf16>
    "tpu.trace_start"() <{level = 10 : i32, message = "bcn,nm->bcm"}> : () -> ()
    %cst_72 = arith.constant dense<0.000000e+00> : vector<2x16x128xf32>
    %225 = tpu.matmul %222, %224, %cst_72 {dimension_numbers = #tpu.dot_dimension_numbers<[2], [0], [0, 1], [1], [0, 0, 0, 1, 1, 1], [], []>} : vector<2x16x128xbf16>, vector<128x128xbf16>, vector<2x16x128xf32> -> vector<2x16x128xf32>
    "tpu.trace_stop"() : () -> ()
    %c0_73 = arith.constant 0 : index
    %c0_74 = arith.constant 0 : index
    %c0_75 = arith.constant 0 : index
    %226 = vector.load %arg18[%c0_73, %c0_74, %c0_75] : memref<1x1x128xf32, #tpu.memory_space<vmem>>, vector<1x1x128xf32>
    %227 = vector.shape_cast %226 : vector<1x1x128xf32> to vector<1x128xf32>
    %228 = vector.shape_cast %227 : vector<1x128xf32> to vector<1x1x128xf32>
    %229 = vector.broadcast %228 : vector<1x1x128xf32> to vector<2x16x128xf32>
    %230 = arith.addf %225, %229 : vector<2x16x128xf32>
    %231 = arith.addf %230, %6 : vector<2x16x128xf32>
    %c0_76 = arith.constant 0 : index
    %c0_77 = arith.constant 0 : index
    %c0_78 = arith.constant 0 : index
    %232 = vector.load %arg19[%c0_76, %c0_77, %c0_78] : memref<1x16x16xbf16, #tpu.memory_space<vmem>>, vector<1x16x16xbf16>
    %233 = vector.shape_cast %232 : vector<1x16x16xbf16> to vector<16x16xbf16>
    %c0_79 = arith.constant 0 : index
    %c0_80 = arith.constant 0 : index
    %c0_81 = arith.constant 0 : index
    %234 = vector.load %arg20[%c0_79, %c0_80, %c0_81] : memref<1x16x1xf32, #tpu.memory_space<vmem>>, vector<1x16x1xf32>
    %235 = vector.shape_cast %234 : vector<1x16x1xf32> to vector<16x1xf32>
    %236 = vector.extract_strided_slice %231 {offsets = [0, 0, 0], sizes = [1, 16, 128], strides = [1, 1, 1]} : vector<2x16x128xf32> to vector<1x16x128xf32>
    %237 = vector.shape_cast %236 : vector<1x16x128xf32> to vector<16x128xf32>
    %238 = vector.extract_strided_slice %231 {offsets = [1, 0, 0], sizes = [1, 16, 128], strides = [1, 1, 1]} : vector<2x16x128xf32> to vector<1x16x128xf32>
    %239 = vector.shape_cast %238 : vector<1x16x128xf32> to vector<16x128xf32>
    %240 = tpu.concatenate %237, %239 in 1 : vector<16x128xf32>, vector<16x128xf32> -> vector<16x256xf32>
    %241 = arith.truncf %240 : vector<16x256xf32> to vector<16x256xbf16>
    %cst_82 = arith.constant dense<0.000000e+00> : vector<16x256xf32>
    %242 = tpu.matmul %233, %241, %cst_82 {dimension_numbers = #tpu.dot_dimension_numbers<[1], [0], [0], [1], [0, 0, 1, 1], [], []>} : vector<16x16xbf16>, vector<16x256xbf16>, vector<16x256xf32> -> vector<16x256xf32>
    %243 = vector.broadcast %235 : vector<16x1xf32> to vector<16x256xf32>
    %244 = arith.addf %242, %243 : vector<16x256xf32>
    %245 = vector.extract_strided_slice %244 {offsets = [0, 0], sizes = [16, 128], strides = [1, 1]} : vector<16x256xf32> to vector<16x128xf32>
    %246 = vector.extract_strided_slice %244 {offsets = [0, 128], sizes = [16, 128], strides = [1, 1]} : vector<16x256xf32> to vector<16x128xf32>
    %247 = vector.shape_cast %245 : vector<16x128xf32> to vector<1x16x128xf32>
    %248 = vector.shape_cast %246 : vector<16x128xf32> to vector<1x16x128xf32>
    %249 = tpu.concatenate %247, %248 in 0 : vector<1x16x128xf32>, vector<1x16x128xf32> -> vector<2x16x128xf32>
    %cst_83 = arith.constant 0.000000e+00 : f32
    %250 = vector.shape_cast %2 : vector<1x1x128xi1> to vector<1x1x128xi1>
    %251 = vector.broadcast %250 : vector<1x1x128xi1> to vector<2x16x128xi1>
    %252 = vector.broadcast %cst_83 : f32 to vector<2x16x128xf32>
    %253 = arith.select %251, %249, %252 : vector<2x16x128xi1>, vector<2x16x128xf32>
    %c0_84 = arith.constant 0 : index
    %c0_85 = arith.constant 0 : index
    %c0_86 = arith.constant 0 : index
    %254 = vector.load %arg22[%c0_84, %c0_85, %c0_86] : memref<2x16x128xf32, #tpu.memory_space<vmem>>, vector<2x16x128xf32>
    tpu.vector_store %arg22[%c0_84, %c0_85, %c0_86], %253 {strides = array<i32>} : memref<2x16x128xf32, #tpu.memory_space<vmem>>, vector<2x16x128xf32>,
    %c1_i32_87 = arith.constant 1 : i32
    %255 = arith.cmpi eq, %arg0, %c1_i32_87 : i32
    %256 = arith.extui %255 : i1 to i32
    %c0_i32_88 = arith.constant 0 : i32
    %257 = arith.cmpi ne, %256, %c0_i32_88 : i32
    scf.if %257 {
      %258 = vector.extract_strided_slice %253 {offsets = [0, 0, 0], sizes = [2, 16, 16], strides = [1, 1, 1]} : vector<2x16x128xf32> to vector<2x16x16xf32>
      %c0_89 = arith.constant 0 : index
      %c0_90 = arith.constant 0 : index
      %c0_91 = arith.constant 0 : index
      %259 = vector.load %arg21[%c0_89, %c0_90, %c0_91] : memref<2x16x16xf32, #tpu.memory_space<vmem>>, vector<2x16x16xf32>
      tpu.vector_store %arg21[%c0_89, %c0_90, %c0_91], %258 {strides = array<i32>} : memref<2x16x16xf32, #tpu.memory_space<vmem>>, vector<2x16x16xf32>,
    } else {
    }
    return
  }
  func.func @transform_0(%arg0: i32) -> i32 {
    %c0_i32 = arith.constant 0 : i32
    %c0_i32_0 = arith.constant 0 : i32
    return %c0_i32 : i32
  }
  func.func @transform_1(%arg0: i32) -> (i32, i32) {
    %c0_i32 = arith.constant 0 : i32
    %c0_i32_0 = arith.constant 0 : i32
    %c0_i32_1 = arith.constant 0 : i32
    return %c0_i32, %c0_i32_0 : i32, i32
  }
  func.func @transform_2(%arg0: i32) -> i32 {
    %c0_i32 = arith.constant 0 : i32
    %c0_i32_0 = arith.constant 0 : i32
    return %c0_i32 : i32
  }
  func.func @transform_3(%arg0: i32) -> (i32, i32, i32) {
    %c0_i32 = arith.constant 0 : i32
    %c0_i32_0 = arith.constant 0 : i32
    %c0_i32_1 = arith.constant 0 : i32
    %c0_i32_2 = arith.constant 0 : i32
    return %c0_i32, %c0_i32_0, %c0_i32_1 : i32, i32, i32
  }
  func.func @transform_4(%arg0: i32) -> (i32, i32) {
    %c0_i32 = arith.constant 0 : i32
    %c0_i32_0 = arith.constant 0 : i32
    %c0_i32_1 = arith.constant 0 : i32
    return %c0_i32, %c0_i32_0 : i32, i32
  }
  func.func @transform_5(%arg0: i32) -> (i32, i32) {
    %c0_i32 = arith.constant 0 : i32
    %c0_i32_0 = arith.constant 0 : i32
    %c0_i32_1 = arith.constant 0 : i32
    return %c0_i32, %c0_i32_0 : i32, i32
  }
  func.func @transform_6(%arg0: i32) -> (i32, i32) {
    %c0_i32 = arith.constant 0 : i32
    %c0_i32_0 = arith.constant 0 : i32
    %c0_i32_1 = arith.constant 0 : i32
    return %c0_i32, %c0_i32_0 : i32, i32
  }
  func.func @transform_7(%arg0: i32) -> (i32, i32) {
    %c0_i32 = arith.constant 0 : i32
    %c0_i32_0 = arith.constant 0 : i32
    %c0_i32_1 = arith.constant 0 : i32
    return %c0_i32, %c0_i32_0 : i32, i32
  }
  func.func @transform_8(%arg0: i32) -> (i32, i32, i32) {
    %c0_i32 = arith.constant 0 : i32
    %c0_i32_0 = arith.constant 0 : i32
    %c0_i32_1 = arith.constant 0 : i32
    return %arg0, %c0_i32, %c0_i32_0 : i32, i32, i32
  }
  func.func @transform_9(%arg0: i32) -> (i32, i32, i32) {
    %c0_i32 = arith.constant 0 : i32
    %c0_i32_0 = arith.constant 0 : i32
    %c0_i32_1 = arith.constant 0 : i32
    return %arg0, %c0_i32, %c0_i32_0 : i32, i32, i32
  }
  func.func @transform_10(%arg0: i32) -> (i32, i32, i32, i32) {
    %c0_i32 = arith.constant 0 : i32
    %c0_i32_0 = arith.constant 0 : i32
    %c0_i32_1 = arith.constant 0 : i32
    %c0_i32_2 = arith.constant 0 : i32
    return %arg0, %c0_i32, %c0_i32_0, %c0_i32_1 : i32, i32, i32, i32
  }
  func.func @transform_11(%arg0: i32) -> (i32, i32, i32) {
    %c0_i32 = arith.constant 0 : i32
    %c0_i32_0 = arith.constant 0 : i32
    %c0_i32_1 = arith.constant 0 : i32
    return %arg0, %c0_i32, %c0_i32_0 : i32, i32, i32
  }
  func.func @transform_12(%arg0: i32) -> (i32, i32, i32) {
    %c0_i32 = arith.constant 0 : i32
    %c0_i32_0 = arith.constant 0 : i32
    %c0_i32_1 = arith.constant 0 : i32
    return %arg0, %c0_i32, %c0_i32_0 : i32, i32, i32
  }
  func.func @transform_13(%arg0: i32) -> (i32, i32, i32) {
    %c0_i32 = arith.constant 0 : i32
    %c0_i32_0 = arith.constant 0 : i32
    %c0_i32_1 = arith.constant 0 : i32
    return %arg0, %c0_i32, %c0_i32_0 : i32, i32, i32
  }
  func.func @transform_14(%arg0: i32) -> (i32, i32, i32) {
    %c0_i32 = arith.constant 0 : i32
    %c0_i32_0 = arith.constant 0 : i32
    %c0_i32_1 = arith.constant 0 : i32
    return %arg0, %c0_i32, %c0_i32_0 : i32, i32, i32
  }
  func.func @transform_15(%arg0: i32) -> (i32, i32, i32) {
    %c0_i32 = arith.constant 0 : i32
    %c0_i32_0 = arith.constant 0 : i32
    %c0_i32_1 = arith.constant 0 : i32
    return %arg0, %c0_i32, %c0_i32_0 : i32, i32, i32
  }
  func.func @transform_16(%arg0: i32) -> (i32, i32, i32) {
    %c0_i32 = arith.constant 0 : i32
    %c0_i32_0 = arith.constant 0 : i32
    %c0_i32_1 = arith.constant 0 : i32
    return %arg0, %c0_i32, %c0_i32_0 : i32, i32, i32
  }
  func.func @transform_17(%arg0: i32) -> (i32, i32, i32) {
    %c0_i32 = arith.constant 0 : i32
    %c0_i32_0 = arith.constant 0 : i32
    %c0_i32_1 = arith.constant 0 : i32
    return %arg0, %c0_i32, %c0_i32_0 : i32, i32, i32
  }
  func.func @transform_18(%arg0: i32) -> (i32, i32, i32) {
    %c0_i32 = arith.constant 0 : i32
    %c0_i32_0 = arith.constant 0 : i32
    %c0_i32_1 = arith.constant 0 : i32
    return %arg0, %c0_i32, %c0_i32_0 : i32, i32, i32
  }
  func.func @transform_19(%arg0: i32) -> (i32, i32, i32) {
    %c0_i32 = arith.constant 0 : i32
    %c0_i32_0 = arith.constant 0 : i32
    %c0_i32_1 = arith.constant 0 : i32
    return %arg0, %c0_i32, %c0_i32_0 : i32, i32, i32
  }
  func.func @transform_20(%arg0: i32) -> (i32, i32, i32) {
    %c0_i32 = arith.constant 0 : i32
    %c0_i32_0 = arith.constant 0 : i32
    %c0_i32_1 = arith.constant 0 : i32
    %c0_i32_2 = arith.constant 0 : i32
    return %c0_i32, %c0_i32_0, %c0_i32_1 : i32, i32, i32
  }
}

</mosaic_0001>

<llo_original>
// kernel: tpu_custom_call.1
$region0: #{tpu_custom_call.1}
  #allocation0 [shape = 'u32[]', space=smem, size = 0x4, offset = 0x4, fixed_abs, tag = 'smem constant byte address 0x4 - core index']
  #allocation1 [shape = 'u32[144,128]{1,0:T(1,128)}', space=vmem, size = 0x12000, scoped, tag = 'internal scratch']
  #allocation2 [shape = 'f32[2,16,128]{2,1,0:T(8,128)}', space=vmem, size = 0x4000, scoped, tag = 'scratch operand']
  %s0 = inlined_call_operand.vmem [shape: s32[2], index: 0, kind: input, shape index: {}]
  %s1 = inlined_call_operand.vmem [shape: f32[2,6], index: 1, kind: input, shape index: {}]
  %s2 = inlined_call_operand.vmem [shape: f32[2], index: 2, kind: input, shape index: {}]
  %s3 = inlined_call_operand.vmem [shape: f32[2,16,16], index: 3, kind: input, shape index: {}]
  %s4 = inlined_call_operand.vmem [shape: bf16[16,48], index: 4, kind: input, shape index: {}]
  %s5 = inlined_call_operand.vmem [shape: f32[16,1], index: 5, kind: input, shape index: {}]
  %s6 = inlined_call_operand.vmem [shape: f32[16,1], index: 6, kind: input, shape index: {}]
  %s7 = inlined_call_operand.vmem [shape: f32[16,1], index: 7, kind: input, shape index: {}]
  %s8 = inlined_call_operand.vmem [shape: f32[2,16,1], index: 8, kind: input, shape index: {}]
  %s9 = inlined_call_operand.vmem [shape: f32[2,16,1], index: 9, kind: input, shape index: {}]
  %s10 = inlined_call_operand.vmem [shape: f32[2,2,16,1], index: 10, kind: input, shape index: {}]
  %s11 = inlined_call_operand.vmem [shape: f32[2,16,1], index: 11, kind: input, shape index: {}]
  %s12 = inlined_call_operand.vmem [shape: bf16[2,2,16], index: 12, kind: input, shape index: {}]
  %s13 = inlined_call_operand.vmem [shape: f32[2,2,1], index: 13, kind: input, shape index: {}]
  %s14 = inlined_call_operand.vmem [shape: bf16[2,16,2], index: 14, kind: input, shape index: {}]
  %s15 = inlined_call_operand.vmem [shape: f32[2,16,1], index: 15, kind: input, shape index: {}]
  %s16 = inlined_call_operand.vmem [shape: bf16[2,128,128], index: 16, kind: input, shape index: {}]
  %s17 = inlined_call_operand.vmem [shape: f32[2,1,128], index: 17, kind: input, shape index: {}]
  %s18 = inlined_call_operand.vmem [shape: bf16[2,16,16], index: 18, kind: input, shape index: {}]
  %s19 = inlined_call_operand.vmem [shape: f32[2,16,1], index: 19, kind: input, shape index: {}]
  %s20 = inlined_call_operand.hbm [shape: f32[2,16,16], index: 20, kind: output, shape index: {}]
  %s21 = sld [smem:[#allocation0]]
  $region133: #{tpu_custom_call.1} parent=0
    _
  %s23 = ssub.s32 1, %s21
  %s24 = scalar_select 0, %s23, %s21
  $region1: #{tpu_custom_call.1} parent=0
    #allocation3 [shape = 'u8[512]{0}', space=smem, size = 0x200, scoped, tag = 'input window, operand 0, single buffered']
    #allocation4 [shape = 's32[2]{0}', space=sflag, size = 0x8, scoped, tag = 'scoped memory for tpu_custom_call.1']
    #allocation5 [shape = 's32[2]{0}', space=sflag, size = 0x8, scoped, tag = 'scoped memory for tpu_custom_call.1']
    #allocation6 [shape = 'u8[1024]{0}', space=smem, size = 0x400, scoped, tag = 'input window, operand 1, single buffered']
    #allocation7 [shape = 's32[1]{0}', space=sflag, size = 0x4, scoped, tag = 'scoped memory for tpu_custom_call.1']
    #allocation8 [shape = 'u8[512]{0}', space=smem, size = 0x200, scoped, tag = 'input window, operand 2, single buffered']
    #allocation9 [shape = 'u8[16384]{0}', space=vmem, size = 0x4000, scoped, tag = 'output window, operand 0, single buffered']
    %25 = vsyncpa [#allocation5], 0
    %26 = vsyncpa [#allocation7], 0
    %27 = vsyncpa [#allocation4], 0
    loop: start=0, step=1, limit=4
    $region2: #{tpu_custom_call.1} parent=1 // loop_pre_header
      _
    $region3: #{tpu_custom_call.1} parent=1 // loop_header
      %s29 = sphi 0, %s33
      %p30 = scmp.ge.s32.totalorder %s29, 4
      %s37 = sphi 0, %s37
      %s39 = sphi 0, %s37
      %s40 = sphi 0, %s39
      %s54 = sphi 0, %s40
      %s58 = sphi 0, %s58
      %s60 = sphi 0, %s58
      %s61 = sphi 0, %s60
      %s75 = sphi 0, %s61
      %s79 = sphi 0, %s79
      %s81 = sphi 0, %s79
      %s82 = sphi 0, %s81
      %s96 = sphi 0, %s82
      %s100 = sphi 0, %s100
      %s102 = sphi 0, %s100
      %s103 = sphi 0, %s102
      %s117 = sphi 0, %s103
      %s121 = sphi 0, %s121
      %s123 = sphi 0, %s121
      %s124 = sphi 0, %s123
      %s138 = sphi 0, %s124
      %s142 = sphi 0, %s142
      %s144 = sphi 0, %s142
      %s145 = sphi 0, %s144
      %s159 = sphi 0, %s145
      %s163 = sphi 0, %s163
      %s165 = sphi 0, %s163
      %s166 = sphi 0, %s165
      %s180 = sphi 0, %s166
      %s184 = sphi 0, %s184
      %s186 = sphi 0, %s184
      %s187 = sphi 0, %s186
      %s201 = sphi 0, %s187
      %s207 = sphi 0, %s209
      %s210 = sphi 0, %s207
      %s211 = sphi 0, %s210
      %s227 = sphi 0, %s211
      %s233 = sphi 0, %s235
      %s236 = sphi 0, %s233
      %s237 = sphi 0, %s236
      %s253 = sphi 0, %s237
      %s259 = sphi 0, %s261
      %s262 = sphi 0, %s259
      %s263 = sphi 0, %s262
      %s279 = sphi 0, %s263
      %s285 = sphi 0, %s287
      %s288 = sphi 0, %s285
      %s289 = sphi 0, %s288
      %s305 = sphi 0, %s289
      %s311 = sphi 0, %s313
      %s314 = sphi 0, %s311
      %s315 = sphi 0, %s314
      %s331 = sphi 0, %s315
      %s337 = sphi 0, %s339
      %s340 = sphi 0, %s337
      %s341 = sphi 0, %s340
      %s357 = sphi 0, %s341
      %s363 = sphi 0, %s365
      %s366 = sphi 0, %s363
      %s367 = sphi 0, %s366
      %s383 = sphi 0, %s367
      %s389 = sphi 0, %s391
      %s392 = sphi 0, %s389
      %s393 = sphi 0, %s392
      %s409 = sphi 0, %s393
      %s415 = sphi 0, %s417
      %s418 = sphi 0, %s415
      %s419 = sphi 0, %s418
      %s435 = sphi 0, %s419
      %s441 = sphi 0, %s443
      %s444 = sphi 0, %s441
      %s445 = sphi 0, %s444
      %s461 = sphi 0, %s445
      %s467 = sphi 0, %s469
      %s470 = sphi 0, %s467
      %s471 = sphi 0, %s470
      %s487 = sphi 0, %s471
      %s493 = sphi 0, %s495
      %s496 = sphi 0, %s493
      %s497 = sphi 0, %s496
      %s513 = sphi 0, %s497
      %s517 = sphi 0, %s517
      %s519 = sphi 0, %s517
      %s520 = sphi 0, %s519
      %s534 = sphi 0, %s520
    $region4: #{tpu_custom_call.1} parent=1 // loop_header_branch
      %32 = sbr.rel (%p30) target = $region8
    $region5: #{tpu_custom_call.1} parent=1 // loop_body
      %s34 = ssub.s32 %s29, 1
      %s35 = ssub.s32 %s29, 2
      %s36 = sadd.s32 %s29, 1
      %s38 = sadd.s32 %s37, 1
      %p41 = scmp.eq.s32.totalorder %s29, 1
      %p42 = scmp.ne.s32.totalorder %s37, %s39
      %p43 = scmp.eq.s32.totalorder %s29, 0
      %p44 = por %p42, %p43
      %p45 = scmp.ne.s32.totalorder %s37, %s39
      %p46 = scmp.eq.s32.totalorder %s34, 1
      %p47 = por %p45, %p46
      %p48 = scmp.ne.s32.totalorder %s39, %s40
      %p49 = scmp.eq.s32.totalorder %s34, 0
      %p50 = por %p48, %p49
      %p51 = scmp.ne.s32.totalorder %s39, %s40
      %p52 = scmp.eq.s32.totalorder %s35, 1
      %p53 = por %p51, %p52
      %p55 = scmp.ne.s32.totalorder %s40, %s54
      %p56 = scmp.eq.s32.totalorder %s35, 0
      %p57 = por %p55, %p56
      %s59 = sadd.s32 %s58, 1
      %p62 = scmp.eq.s32.totalorder %s29, 1
      %p63 = scmp.ne.s32.totalorder %s58, %s60
      %p64 = scmp.eq.s32.totalorder %s29, 0
      %p65 = por %p63, %p64
      %p66 = scmp.ne.s32.totalorder %s58, %s60
      %p67 = scmp.eq.s32.totalorder %s34, 1
      %p68 = por %p66, %p67
      %p69 = scmp.ne.s32.totalorder %s60, %s61
      %p70 = scmp.eq.s32.totalorder %s34, 0
      %p71 = por %p69, %p70
      %p72 = scmp.ne.s32.totalorder %s60, %s61
      %p73 = scmp.eq.s32.totalorder %s35, 1
      %p74 = por %p72, %p73
      %p76 = scmp.ne.s32.totalorder %s61, %s75
      %p77 = scmp.eq.s32.totalorder %s35, 0
      %p78 = por %p76, %p77
      %s80 = sadd.s32 %s79, 1
      %p83 = scmp.eq.s32.totalorder %s29, 1
      %p84 = scmp.ne.s32.totalorder %s79, %s81
      %p85 = scmp.eq.s32.totalorder %s29, 0
      %p86 = por %p84, %p85
      %p87 = scmp.ne.s32.totalorder %s79, %s81
      %p88 = scmp.eq.s32.totalorder %s34, 1
      %p89 = por %p87, %p88
      %p90 = scmp.ne.s32.totalorder %s81, %s82
      %p91 = scmp.eq.s32.totalorder %s34, 0
      %p92 = por %p90, %p91
      %p93 = scmp.ne.s32.totalorder %s81, %s82
      %p94 = scmp.eq.s32.totalorder %s35, 1
      %p95 = por %p93, %p94
      %p97 = scmp.ne.s32.totalorder %s82, %s96
      %p98 = scmp.eq.s32.totalorder %s35, 0
      %p99 = por %p97, %p98
      %s101 = sadd.s32 %s100, 1
      %p104 = scmp.eq.s32.totalorder %s29, 1
      %p105 = scmp.ne.s32.totalorder %s100, %s102
      %p106 = scmp.eq.s32.totalorder %s29, 0
      %p107 = por %p105, %p106
      %p108 = scmp.ne.s32.totalorder %s100, %s102
      %p109 = scmp.eq.s32.totalorder %s34, 1
      %p110 = por %p108, %p109
      %p111 = scmp.ne.s32.totalorder %s102, %s103
      %p112 = scmp.eq.s32.totalorder %s34, 0
      %p113 = por %p111, %p112
      %p114 = scmp.ne.s32.totalorder %s102, %s103
      %p115 = scmp.eq.s32.totalorder %s35, 1
      %p116 = por %p114, %p115
      %p118 = scmp.ne.s32.totalorder %s103, %s117
      %p119 = scmp.eq.s32.totalorder %s35, 0
      %p120 = por %p118, %p119
      %s122 = sadd.s32 %s121, 1
      %p125 = scmp.eq.s32.totalorder %s29, 1
      %p126 = scmp.ne.s32.totalorder %s121, %s123
      %p127 = scmp.eq.s32.totalorder %s29, 0
      %p128 = por %p126, %p127
      %p129 = scmp.ne.s32.totalorder %s121, %s123
      %p130 = scmp.eq.s32.totalorder %s34, 1
      %p131 = por %p129, %p130
      %p132 = scmp.ne.s32.totalorder %s123, %s124
      %p133 = scmp.eq.s32.totalorder %s34, 0
      %p134 = por %p132, %p133
      %p135 = scmp.ne.s32.totalorder %s123, %s124
      %p136 = scmp.eq.s32.totalorder %s35, 1
      %p137 = por %p135, %p136
      %p139 = scmp.ne.s32.totalorder %s124, %s138
      %p140 = scmp.eq.s32.totalorder %s35, 0
      %p141 = por %p139, %p140
      %s143 = sadd.s32 %s142, 1
      %p146 = scmp.eq.s32.totalorder %s29, 1
      %p147 = scmp.ne.s32.totalorder %s142, %s144
      %p148 = scmp.eq.s32.totalorder %s29, 0
      %p149 = por %p147, %p148
      %p150 = scmp.ne.s32.totalorder %s142, %s144
      %p151 = scmp.eq.s32.totalorder %s34, 1
      %p152 = por %p150, %p151
      %p153 = scmp.ne.s32.totalorder %s144, %s145
      %p154 = scmp.eq.s32.totalorder %s34, 0
      %p155 = por %p153, %p154
      %p156 = scmp.ne.s32.totalorder %s144, %s145
      %p157 = scmp.eq.s32.totalorder %s35, 1
      %p158 = por %p156, %p157
      %p160 = scmp.ne.s32.totalorder %s145, %s159
      %p161 = scmp.eq.s32.totalorder %s35, 0
      %p162 = por %p160, %p161
      %s164 = sadd.s32 %s163, 1
      %p167 = scmp.eq.s32.totalorder %s29, 1
      %p168 = scmp.ne.s32.totalorder %s163, %s165
      %p169 = scmp.eq.s32.totalorder %s29, 0
      %p170 = por %p168, %p169
      %p171 = scmp.ne.s32.totalorder %s163, %s165
      %p172 = scmp.eq.s32.totalorder %s34, 1
      %p173 = por %p171, %p172
      %p174 = scmp.ne.s32.totalorder %s165, %s166
      %p175 = scmp.eq.s32.totalorder %s34, 0
      %p176 = por %p174, %p175
      %p177 = scmp.ne.s32.totalorder %s165, %s166
      %p178 = scmp.eq.s32.totalorder %s35, 1
      %p179 = por %p177, %p178
      %p181 = scmp.ne.s32.totalorder %s166, %s180
      %p182 = scmp.eq.s32.totalorder %s35, 0
      %p183 = por %p181, %p182
      %s185 = sadd.s32 %s184, 1
      %p188 = scmp.eq.s32.totalorder %s29, 1
      %p189 = scmp.ne.s32.totalorder %s184, %s186
      %p190 = scmp.eq.s32.totalorder %s29, 0
      %p191 = por %p189, %p190
      %p192 = scmp.ne.s32.totalorder %s184, %s186
      %p193 = scmp.eq.s32.totalorder %s34, 1
      %p194 = por %p192, %p193
      %p195 = scmp.ne.s32.totalorder %s186, %s187
      %p196 = scmp.eq.s32.totalorder %s34, 0
      %p197 = por %p195, %p196
      %p198 = scmp.ne.s32.totalorder %s186, %s187
      %p199 = scmp.eq.s32.totalorder %s35, 1
      %p200 = por %p198, %p199
      %p202 = scmp.ne.s32.totalorder %s187, %s201
      %p203 = scmp.eq.s32.totalorder %s35, 0
      %p204 = por %p202, %p203
      %s205 = ssub.s32 %s29, %s36
      %p206 = scmp.eq.s32.totalorder %s205, 0
      %s208 = sadd.s32 %s207, 1
      %s209 = scalar_select %p206, %s207, %s208
      %p212 = pneg %p206
      %p213 = scmp.eq.s32.totalorder %s29, 1
      %p214 = por %p212, %p213
      %p215 = scmp.ne.s32.totalorder %s207, %s210
      %p216 = scmp.eq.s32.totalorder %s29, 0
      %p217 = por %p215, %p216
      %p218 = scmp.ne.s32.totalorder %s207, %s210
      %p219 = scmp.eq.s32.totalorder %s34, 1
      %p220 = por %p218, %p219
      %p221 = scmp.ne.s32.totalorder %s210, %s211
      %p222 = scmp.eq.s32.totalorder %s34, 0
      %p223 = por %p221, %p222
      %p224 = scmp.ne.s32.totalorder %s210, %s211
      %p225 = scmp.eq.s32.totalorder %s35, 1
      %p226 = por %p224, %p225
      %p228 = scmp.ne.s32.totalorder %s211, %s227
      %p229 = scmp.eq.s32.totalorder %s35, 0
      %p230 = por %p228, %p229
      %s231 = ssub.s32 %s29, %s36
      %p232 = scmp.eq.s32.totalorder %s231, 0
      %s234 = sadd.s32 %s233, 1
      %s235 = scalar_select %p232, %s233, %s234
      %p238 = pneg %p232
      %p239 = scmp.eq.s32.totalorder %s29, 1
      %p240 = por %p238, %p239
      %p241 = scmp.ne.s32.totalorder %s233, %s236
      %p242 = scmp.eq.s32.totalorder %s29, 0
      %p243 = por %p241, %p242
      %p244 = scmp.ne.s32.totalorder %s233, %s236
      %p245 = scmp.eq.s32.totalorder %s34, 1
      %p246 = por %p244, %p245
      %p247 = scmp.ne.s32.totalorder %s236, %s237
      %p248 = scmp.eq.s32.totalorder %s34, 0
      %p249 = por %p247, %p248
      %p250 = scmp.ne.s32.totalorder %s236, %s237
      %p251 = scmp.eq.s32.totalorder %s35, 1
      %p252 = por %p250, %p251
      %p254 = scmp.ne.s32.totalorder %s237, %s253
      %p255 = scmp.eq.s32.totalorder %s35, 0
      %p256 = por %p254, %p255
      %s257 = ssub.s32 %s29, %s36
      %p258 = scmp.eq.s32.totalorder %s257, 0
      %s260 = sadd.s32 %s259, 1
      %s261 = scalar_select %p258, %s259, %s260
      %p264 = pneg %p258
      %p265 = scmp.eq.s32.totalorder %s29, 1
      %p266 = por %p264, %p265
      %p267 = scmp.ne.s32.totalorder %s259, %s262
      %p268 = scmp.eq.s32.totalorder %s29, 0
      %p269 = por %p267, %p268
      %p270 = scmp.ne.s32.totalorder %s259, %s262
      %p271 = scmp.eq.s32.totalorder %s34, 1
      %p272 = por %p270, %p271
      %p273 = scmp.ne.s32.totalorder %s262, %s263
      %p274 = scmp.eq.s32.totalorder %s34, 0
      %p275 = por %p273, %p274
      %p276 = scmp.ne.s32.totalorder %s262, %s263
      %p277 = scmp.eq.s32.totalorder %s35, 1
      %p278 = por %p276, %p277
      %p280 = scmp.ne.s32.totalorder %s263, %s279
      %p281 = scmp.eq.s32.totalorder %s35, 0
      %p282 = por %p280, %p281
      %s283 = ssub.s32 %s29, %s36
      %p284 = scmp.eq.s32.totalorder %s283, 0
      %s286 = sadd.s32 %s285, 1
      %s287 = scalar_select %p284, %s285, %s286
      %p290 = pneg %p284
      %p291 = scmp.eq.s32.totalorder %s29, 1
      %p292 = por %p290, %p291
      %p293 = scmp.ne.s32.totalorder %s285, %s288
      %p294 = scmp.eq.s32.totalorder %s29, 0
      %p295 = por %p293, %p294
      %p296 = scmp.ne.s32.totalorder %s285, %s288
      %p297 = scmp.eq.s32.totalorder %s34, 1
      %p298 = por %p296, %p297
      %p299 = scmp.ne.s32.totalorder %s288, %s289
      %p300 = scmp.eq.s32.totalorder %s34, 0
      %p301 = por %p299, %p300
      %p302 = scmp.ne.s32.totalorder %s288, %s289
      %p303 = scmp.eq.s32.totalorder %s35, 1
      %p304 = por %p302, %p303
      %p306 = scmp.ne.s32.totalorder %s289, %s305
      %p307 = scmp.eq.s32.totalorder %s35, 0
      %p308 = por %p306, %p307
      %s309 = ssub.s32 %s29, %s36
      %p310 = scmp.eq.s32.totalorder %s309, 0
      %s312 = sadd.s32 %s311, 1
      %s313 = scalar_select %p310, %s311, %s312
      %p316 = pneg %p310
      %p317 = scmp.eq.s32.totalorder %s29, 1
      %p318 = por %p316, %p317
      %p319 = scmp.ne.s32.totalorder %s311, %s314
      %p320 = scmp.eq.s32.totalorder %s29, 0
      %p321 = por %p319, %p320
      %p322 = scmp.ne.s32.totalorder %s311, %s314
      %p323 = scmp.eq.s32.totalorder %s34, 1
      %p324 = por %p322, %p323
      %p325 = scmp.ne.s32.totalorder %s314, %s315
      %p326 = scmp.eq.s32.totalorder %s34, 0
      %p327 = por %p325, %p326
      %p328 = scmp.ne.s32.totalorder %s314, %s315
      %p329 = scmp.eq.s32.totalorder %s35, 1
      %p330 = por %p328, %p329
      %p332 = scmp.ne.s32.totalorder %s315, %s331
      %p333 = scmp.eq.s32.totalorder %s35, 0
      %p334 = por %p332, %p333
      %s335 = ssub.s32 %s29, %s36
      %p336 = scmp.eq.s32.totalorder %s335, 0
      %s338 = sadd.s32 %s337, 1
      %s339 = scalar_select %p336, %s337, %s338
      %p342 = pneg %p336
      %p343 = scmp.eq.s32.totalorder %s29, 1
      %p344 = por %p342, %p343
      %p345 = scmp.ne.s32.totalorder %s337, %s340
      %p346 = scmp.eq.s32.totalorder %s29, 0
      %p347 = por %p345, %p346
      %p348 = scmp.ne.s32.totalorder %s337, %s340
      %p349 = scmp.eq.s32.totalorder %s34, 1
      %p350 = por %p348, %p349
      %p351 = scmp.ne.s32.totalorder %s340, %s341
      %p352 = scmp.eq.s32.totalorder %s34, 0
      %p353 = por %p351, %p352
      %p354 = scmp.ne.s32.totalorder %s340, %s341
      %p355 = scmp.eq.s32.totalorder %s35, 1
      %p356 = por %p354, %p355
      %p358 = scmp.ne.s32.totalorder %s341, %s357
      %p359 = scmp.eq.s32.totalorder %s35, 0
      %p360 = por %p358, %p359
      %s361 = ssub.s32 %s29, %s36
      %p362 = scmp.eq.s32.totalorder %s361, 0
      %s364 = sadd.s32 %s363, 1
      %s365 = scalar_select %p362, %s363, %s364
      %p368 = pneg %p362
      %p369 = scmp.eq.s32.totalorder %s29, 1
      %p370 = por %p368, %p369
      %p371 = scmp.ne.s32.totalorder %s363, %s366
      %p372 = scmp.eq.s32.totalorder %s29, 0
      %p373 = por %p371, %p372
      %p374 = scmp.ne.s32.totalorder %s363, %s366
      %p375 = scmp.eq.s32.totalorder %s34, 1
      %p376 = por %p374, %p375
      %p377 = scmp.ne.s32.totalorder %s366, %s367
      %p378 = scmp.eq.s32.totalorder %s34, 0
      %p379 = por %p377, %p378
      %p380 = scmp.ne.s32.totalorder %s366, %s367
      %p381 = scmp.eq.s32.totalorder %s35, 1
      %p382 = por %p380, %p381
      %p384 = scmp.ne.s32.totalorder %s367, %s383
      %p385 = scmp.eq.s32.totalorder %s35, 0
      %p386 = por %p384, %p385
      %s387 = ssub.s32 %s29, %s36
      %p388 = scmp.eq.s32.totalorder %s387, 0
      %s390 = sadd.s32 %s389, 1
      %s391 = scalar_select %p388, %s389, %s390
      %p394 = pneg %p388
      %p395 = scmp.eq.s32.totalorder %s29, 1
      %p396 = por %p394, %p395
      %p397 = scmp.ne.s32.totalorder %s389, %s392
      %p398 = scmp.eq.s32.totalorder %s29, 0
      %p399 = por %p397, %p398
      %p400 = scmp.ne.s32.totalorder %s389, %s392
      %p401 = scmp.eq.s32.totalorder %s34, 1
      %p402 = por %p400, %p401
      %p403 = scmp.ne.s32.totalorder %s392, %s393
      %p404 = scmp.eq.s32.totalorder %s34, 0
      %p405 = por %p403, %p404
      %p406 = scmp.ne.s32.totalorder %s392, %s393
      %p407 = scmp.eq.s32.totalorder %s35, 1
      %p408 = por %p406, %p407
      %p410 = scmp.ne.s32.totalorder %s393, %s409
      %p411 = scmp.eq.s32.totalorder %s35, 0
      %p412 = por %p410, %p411
      %s413 = ssub.s32 %s29, %s36
      %p414 = scmp.eq.s32.totalorder %s413, 0
      %s416 = sadd.s32 %s415, 1
      %s417 = scalar_select %p414, %s415, %s416
      %p420 = pneg %p414
      %p421 = scmp.eq.s32.totalorder %s29, 1
      %p422 = por %p420, %p421
      %p423 = scmp.ne.s32.totalorder %s415, %s418
      %p424 = scmp.eq.s32.totalorder %s29, 0
      %p425 = por %p423, %p424
      %p426 = scmp.ne.s32.totalorder %s415, %s418
      %p427 = scmp.eq.s32.totalorder %s34, 1
      %p428 = por %p426, %p427
      %p429 = scmp.ne.s32.totalorder %s418, %s419
      %p430 = scmp.eq.s32.totalorder %s34, 0
      %p431 = por %p429, %p430
      %p432 = scmp.ne.s32.totalorder %s418, %s419
      %p433 = scmp.eq.s32.totalorder %s35, 1
      %p434 = por %p432, %p433
      %p436 = scmp.ne.s32.totalorder %s419, %s435
      %p437 = scmp.eq.s32.totalorder %s35, 0
      %p438 = por %p436, %p437
      %s439 = ssub.s32 %s29, %s36
      %p440 = scmp.eq.s32.totalorder %s439, 0
      %s442 = sadd.s32 %s441, 1
      %s443 = scalar_select %p440, %s441, %s442
      %p446 = pneg %p440
      %p447 = scmp.eq.s32.totalorder %s29, 1
      %p448 = por %p446, %p447
      %p449 = scmp.ne.s32.totalorder %s441, %s444
      %p450 = scmp.eq.s32.totalorder %s29, 0
      %p451 = por %p449, %p450
      %p452 = scmp.ne.s32.totalorder %s441, %s444
      %p453 = scmp.eq.s32.totalorder %s34, 1
      %p454 = por %p452, %p453
      %p455 = scmp.ne.s32.totalorder %s444, %s445
      %p456 = scmp.eq.s32.totalorder %s34, 0
      %p457 = por %p455, %p456
      %p458 = scmp.ne.s32.totalorder %s444, %s445
      %p459 = scmp.eq.s32.totalorder %s35, 1
      %p460 = por %p458, %p459
      %p462 = scmp.ne.s32.totalorder %s445, %s461
      %p463 = scmp.eq.s32.totalorder %s35, 0
      %p464 = por %p462, %p463
      %s465 = ssub.s32 %s29, %s36
      %p466 = scmp.eq.s32.totalorder %s465, 0
      %s468 = sadd.s32 %s467, 1
      %s469 = scalar_select %p466, %s467, %s468
      %p472 = pneg %p466
      %p473 = scmp.eq.s32.totalorder %s29, 1
      %p474 = por %p472, %p473
      %p475 = scmp.ne.s32.totalorder %s467, %s470
      %p476 = scmp.eq.s32.totalorder %s29, 0
      %p477 = por %p475, %p476
      %p478 = scmp.ne.s32.totalorder %s467, %s470
      %p479 = scmp.eq.s32.totalorder %s34, 1
      %p480 = por %p478, %p479
      %p481 = scmp.ne.s32.totalorder %s470, %s471
      %p482 = scmp.eq.s32.totalorder %s34, 0
      %p483 = por %p481, %p482
      %p484 = scmp.ne.s32.totalorder %s470, %s471
      %p485 = scmp.eq.s32.totalorder %s35, 1
      %p486 = por %p484, %p485
      %p488 = scmp.ne.s32.totalorder %s471, %s487
      %p489 = scmp.eq.s32.totalorder %s35, 0
      %p490 = por %p488, %p489
      %s491 = ssub.s32 %s29, %s36
      %p492 = scmp.eq.s32.totalorder %s491, 0
      %s494 = sadd.s32 %s493, 1
      %s495 = scalar_select %p492, %s493, %s494
      %p498 = pneg %p492
      %p499 = scmp.eq.s32.totalorder %s29, 1
      %p500 = por %p498, %p499
      %p501 = scmp.ne.s32.totalorder %s493, %s496
      %p502 = scmp.eq.s32.totalorder %s29, 0
      %p503 = por %p501, %p502
      %p504 = scmp.ne.s32.totalorder %s493, %s496
      %p505 = scmp.eq.s32.totalorder %s34, 1
      %p506 = por %p504, %p505
      %p507 = scmp.ne.s32.totalorder %s496, %s497
      %p508 = scmp.eq.s32.totalorder %s34, 0
      %p509 = por %p507, %p508
      %p510 = scmp.ne.s32.totalorder %s496, %s497
      %p511 = scmp.eq.s32.totalorder %s35, 1
      %p512 = por %p510, %p511
      %p514 = scmp.ne.s32.totalorder %s497, %s513
      %p515 = scmp.eq.s32.totalorder %s35, 0
      %p516 = por %p514, %p515
      %s518 = sadd.s32 %s517, 1
      %p521 = scmp.eq.s32.totalorder %s29, 1
      %p522 = scmp.ne.s32.totalorder %s517, %s519
      %p523 = scmp.eq.s32.totalorder %s29, 0
      %p524 = por %p522, %p523
      %p525 = scmp.ne.s32.totalorder %s517, %s519
      %p526 = scmp.eq.s32.totalorder %s34, 1
      %p527 = por %p525, %p526
      %p528 = scmp.ne.s32.totalorder %s519, %s520
      %p529 = scmp.eq.s32.totalorder %s34, 0
      %p530 = por %p528, %p529
      %p531 = scmp.ne.s32.totalorder %s519, %s520
      %p532 = scmp.eq.s32.totalorder %s35, 1
      %p533 = por %p531, %p532
      %p535 = scmp.ne.s32.totalorder %s520, %s534
      %p536 = scmp.eq.s32.totalorder %s35, 0
      %p537 = por %p535, %p536
      %p538 = scmp.le.s32.totalorder 1, %s29
      %p539 = scmp.lt.s32.totalorder %s29, 3
      %p540 = pnand %p538, %p539
      %p541 = pneg %p540
      // Predicated region
      $region9: #{tpu_custom_call.1} parent=5 // pred_check
        _
      $region10: #{tpu_custom_call.1} parent=5 // pred_check_branch
        %543 = sbr.rel (%p540) target = $region12
      $region11: #{tpu_custom_call.1} parent=5 // pred_region
        %s544 = ssub.s32 %s29, 1
        // Predicated region
        $region13: #{tpu_custom_call.1} parent=11 // pred_check
          %p545 = pneg %p50
        $region14: #{tpu_custom_call.1} parent=11 // pred_check_branch
          %547 = sbr.rel (%p545) target = $region16
        $region15: #{tpu_custom_call.1} parent=11 // pred_region
          %s549 = ssub.s32 16, 16
          %550 = vsyncadd [#allocation5], %s549
          %s552 = sshll.u32 %s0, 4
          %s553 = int_to_ptr.vmem [resolvable:$true] %s552
          %555 = dma.vmem_to_smem %s553, 16, [#allocation3], [#allocation5]
        $region16: #{tpu_custom_call.1} parent=11 // pred_fallthru
          _
        // Predicated region
        $region17: #{tpu_custom_call.1} parent=11 // pred_check
          %p556 = pneg %p71
        $region18: #{tpu_custom_call.1} parent=11 // pred_check_branch
          %558 = sbr.rel (%p556) target = $region20
        $region19: #{tpu_custom_call.1} parent=11 // pred_region
          %s560 = ssub.s32 32, 32
          %561 = vsyncadd [#allocation7], %s560
          %s563 = sshll.u32 %s1, 4
          %s564 = int_to_ptr.vmem [resolvable:$true] %s563
          %566 = dma.vmem_to_smem %s564, 32, [#allocation6], [#allocation7]
        $region20: #{tpu_custom_call.1} parent=11 // pred_fallthru
          _
        // Predicated region
        $region21: #{tpu_custom_call.1} parent=11 // pred_check
          %p567 = pneg %p92
        $region22: #{tpu_custom_call.1} parent=11 // pred_check_branch
          %569 = sbr.rel (%p567) target = $region24
        $region23: #{tpu_custom_call.1} parent=11 // pred_region
          %s571 = ssub.s32 16, 16
          %572 = vsyncadd [#allocation7], %s571
          %s574 = sshll.u32 %s2, 4
          %s575 = int_to_ptr.vmem [resolvable:$true] %s574
          %577 = dma.vmem_to_smem %s575, 16, [#allocation8], [#allocation7]
        $region24: #{tpu_custom_call.1} parent=11 // pred_fallthru
          _
        // Predicated region
        $region25: #{tpu_custom_call.1} parent=11 // pred_check
          %p578 = pneg %p113
        $region26: #{tpu_custom_call.1} parent=11 // pred_check_branch
          %580 = sbr.rel (%p578) target = $region28
        $region27: #{tpu_custom_call.1} parent=11 // pred_region
          _
        $region28: #{tpu_custom_call.1} parent=11 // pred_fallthru
          _
        // Predicated region
        $region29: #{tpu_custom_call.1} parent=11 // pred_check
          %p581 = pneg %p134
        $region30: #{tpu_custom_call.1} parent=11 // pred_check_branch
          %583 = sbr.rel (%p581) target = $region32
        $region31: #{tpu_custom_call.1} parent=11 // pred_region
          _
        $region32: #{tpu_custom_call.1} parent=11 // pred_fallthru
          _
        // Predicated region
        $region33: #{tpu_custom_call.1} parent=11 // pred_check
          %p584 = pneg %p155
        $region34: #{tpu_custom_call.1} parent=11 // pred_check_branch
          %586 = sbr.rel (%p584) target = $region36
        $region35: #{tpu_custom_call.1} parent=11 // pred_region
          _
        $region36: #{tpu_custom_call.1} parent=11 // pred_fallthru
          _
        // Predicated region
        $region37: #{tpu_custom_call.1} parent=11 // pred_check
          %p587 = pneg %p176
        $region38: #{tpu_custom_call.1} parent=11 // pred_check_branch
          %589 = sbr.rel (%p587) target = $region40
        $region39: #{tpu_custom_call.1} parent=11 // pred_region
          _
        $region40: #{tpu_custom_call.1} parent=11 // pred_fallthru
          _
        // Predicated region
        $region41: #{tpu_custom_call.1} parent=11 // pred_check
          %p590 = pneg %p197
        $region42: #{tpu_custom_call.1} parent=11 // pred_check_branch
          %592 = sbr.rel (%p590) target = $region44
        $region43: #{tpu_custom_call.1} parent=11 // pred_region
          _
        $region44: #{tpu_custom_call.1} parent=11 // pred_fallthru
          _
      $region12: #{tpu_custom_call.1} parent=5 // pred_fallthru
        _
      %p593 = scmp.lt.s32.totalorder %s29, 2
      // Predicated region
      $region45: #{tpu_custom_call.1} parent=5 // pred_check
        %p594 = pneg %p593
      $region46: #{tpu_custom_call.1} parent=5 // pred_check_branch
        %596 = sbr.rel (%p594) target = $region48
      $region47: #{tpu_custom_call.1} parent=5 // pred_region
        // Predicated region
        $region49: #{tpu_custom_call.1} parent=47 // pred_check
          %p597 = pneg %p217
        $region50: #{tpu_custom_call.1} parent=47 // pred_check_branch
          %599 = sbr.rel (%p597) target = $region52
        $region51: #{tpu_custom_call.1} parent=47 // pred_region
          %p600 = scmp.lt.s32.totalorder %s29, 1
          %s601 = scalar_select %p600, %s29, 1
          %s602 = smul.addr %s601, 2
          %s603 = smul.addr %s602, 8
          %s604 = scalar_lea.vmem %s8, %s603
        $region52: #{tpu_custom_call.1} parent=47 // pred_fallthru
          _
        // Predicated region
        $region53: #{tpu_custom_call.1} parent=47 // pred_check
          %p605 = pneg %p243
        $region54: #{tpu_custom_call.1} parent=47 // pred_check_branch
          %607 = sbr.rel (%p605) target = $region56
        $region55: #{tpu_custom_call.1} parent=47 // pred_region
          %p608 = scmp.lt.s32.totalorder %s29, 1
          %s609 = scalar_select %p608, %s29, 1
          %s610 = smul.addr %s609, 2
          %s611 = smul.addr %s610, 8
          %s612 = scalar_lea.vmem %s9, %s611
        $region56: #{tpu_custom_call.1} parent=47 // pred_fallthru
          _
        // Predicated region
        $region57: #{tpu_custom_call.1} parent=47 // pred_check
          %p613 = pneg %p269
        $region58: #{tpu_custom_call.1} parent=47 // pred_check_branch
          %615 = sbr.rel (%p613) target = $region60
        $region59: #{tpu_custom_call.1} parent=47 // pred_region
          %p616 = scmp.lt.s32.totalorder %s29, 1
          %s617 = scalar_select %p616, %s29, 1
          %s618 = smul.addr %s617, 4
          %s619 = smul.addr %s618, 8
          %s620 = scalar_lea.vmem %s10, %s619
        $region60: #{tpu_custom_call.1} parent=47 // pred_fallthru
          _
        // Predicated region
        $region61: #{tpu_custom_call.1} parent=47 // pred_check
          %p621 = pneg %p295
        $region62: #{tpu_custom_call.1} parent=47 // pred_check_branch
          %623 = sbr.rel (%p621) target = $region64
        $region63: #{tpu_custom_call.1} parent=47 // pred_region
          %p624 = scmp.lt.s32.totalorder %s29, 1
          %s625 = scalar_select %p624, %s29, 1
          %s626 = smul.addr %s625, 2
          %s627 = smul.addr %s626, 8
          %s628 = scalar_lea.vmem %s11, %s627
        $region64: #{tpu_custom_call.1} parent=47 // pred_fallthru
          _
        // Predicated region
        $region65: #{tpu_custom_call.1} parent=47 // pred_check
          %p629 = pneg %p321
        $region66: #{tpu_custom_call.1} parent=47 // pred_check_branch
          %631 = sbr.rel (%p629) target = $region68
        $region67: #{tpu_custom_call.1} parent=47 // pred_region
          %p632 = scmp.lt.s32.totalorder %s29, 1
          %s633 = scalar_select %p632, %s29, 1
          %s634 = scalar_lea.vmem %s12, %s633
        $region68: #{tpu_custom_call.1} parent=47 // pred_fallthru
          _
        // Predicated region
        $region69: #{tpu_custom_call.1} parent=47 // pred_check
          %p635 = pneg %p347
        $region70: #{tpu_custom_call.1} parent=47 // pred_check_branch
          %637 = sbr.rel (%p635) target = $region72
        $region71: #{tpu_custom_call.1} parent=47 // pred_region
          %p638 = scmp.lt.s32.totalorder %s29, 1
          %s639 = scalar_select %p638, %s29, 1
          %s640 = smul.addr %s639, 2
          %s641 = scalar_lea.vmem %s13, %s640
        $region72: #{tpu_custom_call.1} parent=47 // pred_fallthru
          _
        // Predicated region
        $region73: #{tpu_custom_call.1} parent=47 // pred_check
          %p642 = pneg %p373
        $region74: #{tpu_custom_call.1} parent=47 // pred_check_branch
          %644 = sbr.rel (%p642) target = $region76
        $region75: #{tpu_custom_call.1} parent=47 // pred_region
          %p645 = scmp.lt.s32.totalorder %s29, 1
          %s646 = scalar_select %p645, %s29, 1
          %s647 = smul.addr %s646, 2
          %s648 = smul.addr %s647, 4
          %s649 = scalar_lea.vmem %s14, %s648
        $region76: #{tpu_custom_call.1} parent=47 // pred_fallthru
          _
        // Predicated region
        $region77: #{tpu_custom_call.1} parent=47 // pred_check
          %p650 = pneg %p399
        $region78: #{tpu_custom_call.1} parent=47 // pred_check_branch
          %652 = sbr.rel (%p650) target = $region80
        $region79: #{tpu_custom_call.1} parent=47 // pred_region
          %p653 = scmp.lt.s32.totalorder %s29, 1
          %s654 = scalar_select %p653, %s29, 1
          %s655 = smul.addr %s654, 2
          %s656 = smul.addr %s655, 8
          %s657 = scalar_lea.vmem %s15, %s656
        $region80: #{tpu_custom_call.1} parent=47 // pred_fallthru
          _
        // Predicated region
        $region81: #{tpu_custom_call.1} parent=47 // pred_check
          %p658 = pneg %p425
        $region82: #{tpu_custom_call.1} parent=47 // pred_check_branch
          %660 = sbr.rel (%p658) target = $region84
        $region83: #{tpu_custom_call.1} parent=47 // pred_region
          %p661 = scmp.lt.s32.totalorder %s29, 1
          %s662 = scalar_select %p661, %s29, 1
          %s663 = smul.addr %s662, 16
          %s664 = smul.addr %s663, 4
          %s665 = scalar_lea.vmem %s16, %s664
        $region84: #{tpu_custom_call.1} parent=47 // pred_fallthru
          _
        // Predicated region
        $region85: #{tpu_custom_call.1} parent=47 // pred_check
          %p666 = pneg %p451
        $region86: #{tpu_custom_call.1} parent=47 // pred_check_branch
          %668 = sbr.rel (%p666) target = $region88
        $region87: #{tpu_custom_call.1} parent=47 // pred_region
          %p669 = scmp.lt.s32.totalorder %s29, 1
          %s670 = scalar_select %p669, %s29, 1
          %s671 = scalar_lea.vmem %s17, %s670
        $region88: #{tpu_custom_call.1} parent=47 // pred_fallthru
          _
        // Predicated region
        $region89: #{tpu_custom_call.1} parent=47 // pred_check
          %p672 = pneg %p477
        $region90: #{tpu_custom_call.1} parent=47 // pred_check_branch
          %674 = sbr.rel (%p672) target = $region92
        $region91: #{tpu_custom_call.1} parent=47 // pred_region
          %p675 = scmp.lt.s32.totalorder %s29, 1
          %s676 = scalar_select %p675, %s29, 1
          %s677 = smul.addr %s676, 2
          %s678 = smul.addr %s677, 4
          %s679 = scalar_lea.vmem %s18, %s678
        $region92: #{tpu_custom_call.1} parent=47 // pred_fallthru
          _
        // Predicated region
        $region93: #{tpu_custom_call.1} parent=47 // pred_check
          %p680 = pneg %p503
        $region94: #{tpu_custom_call.1} parent=47 // pred_check_branch
          %682 = sbr.rel (%p680) target = $region96
        $region95: #{tpu_custom_call.1} parent=47 // pred_region
          %p683 = scmp.lt.s32.totalorder %s29, 1
          %s684 = scalar_select %p683, %s29, 1
          %s685 = smul.addr %s684, 2
          %s686 = smul.addr %s685, 8
          %s687 = scalar_lea.vmem %s19, %s686
        $region96: #{tpu_custom_call.1} parent=47 // pred_fallthru
          _
      $region48: #{tpu_custom_call.1} parent=5 // pred_fallthru
        _
      %p688 = scmp.le.s32.totalorder 1, %s29
      %p689 = scmp.lt.s32.totalorder %s29, 3
      %p690 = pnand %p688, %p689
      %p691 = pneg %p690
      // Predicated region
      $region97: #{tpu_custom_call.1} parent=5 // pred_check
        _
      $region98: #{tpu_custom_call.1} parent=5 // pred_check_branch
        %693 = sbr.rel (%p690) target = $region100
      $region99: #{tpu_custom_call.1} parent=5 // pred_region
        %s694 = ssub.s32 %s29, 1
        // Predicated region
        $region101: #{tpu_custom_call.1} parent=99 // pred_check
          %p695 = pneg %p50
        $region102: #{tpu_custom_call.1} parent=99 // pred_check_branch
          %697 = sbr.rel (%p695) target = $region104
        $region103: #{tpu_custom_call.1} parent=99 // pred_region
          %698 = dma.done [#allocation5], 16
        $region104: #{tpu_custom_call.1} parent=99 // pred_fallthru
          _
        // Predicated region
        $region105: #{tpu_custom_call.1} parent=99 // pred_check
          %p699 = pneg %p71
        $region106: #{tpu_custom_call.1} parent=99 // pred_check_branch
          %701 = sbr.rel (%p699) target = $region108
        $region107: #{tpu_custom_call.1} parent=99 // pred_region
          %702 = dma.done [#allocation7], 32
        $region108: #{tpu_custom_call.1} parent=99 // pred_fallthru
          _
        // Predicated region
        $region109: #{tpu_custom_call.1} parent=99 // pred_check
          %p703 = pneg %p92
        $region110: #{tpu_custom_call.1} parent=99 // pred_check_branch
          %705 = sbr.rel (%p703) target = $region112
        $region111: #{tpu_custom_call.1} parent=99 // pred_region
          %706 = dma.done [#allocation7], 16
        $region112: #{tpu_custom_call.1} parent=99 // pred_fallthru
          _
        %707 = sfence
        %p708 = pneg %p50
        %p709 = pneg %p47
        %p710 = pneg %p71
        %p711 = pneg %p68
        %p712 = pneg %p92
        %p713 = pneg %p89
        %p714 = pneg %p113
        %p715 = pneg %p110
        %p716 = pneg %p134
        %p717 = pneg %p131
        %p718 = pneg %p155
        %p719 = pneg %p152
        %p720 = pneg %p176
        %p721 = pneg %p173
        %p722 = pneg %p197
        %p723 = pneg %p194
        %p724 = scmp.lt.s32.totalorder %s34, 1
        %s725 = scalar_select %p724, %s34, 1
        %s726 = smul.addr %s725, 2
        %s727 = smul.addr %s726, 8
        %s728 = scalar_lea.vmem %s8, %s727
        %p729 = pneg %p223
        %p730 = pneg %p220
        %p731 = scmp.lt.s32.totalorder %s34, 1
        %s732 = scalar_select %p731, %s34, 1
        %s733 = smul.addr %s732, 2
        %s734 = smul.addr %s733, 8
        %s735 = scalar_lea.vmem %s9, %s734
        %p736 = pneg %p249
        %p737 = pneg %p246
        %p738 = scmp.lt.s32.totalorder %s34, 1
        %s739 = scalar_select %p738, %s34, 1
        %s740 = smul.addr %s739, 4
        %s741 = smul.addr %s740, 8
        %s742 = scalar_lea.vmem %s10, %s741
        %p743 = pneg %p275
        %p744 = pneg %p272
        %p745 = scmp.lt.s32.totalorder %s34, 1
        %s746 = scalar_select %p745, %s34, 1
        %s747 = smul.addr %s746, 2
        %s748 = smul.addr %s747, 8
        %s749 = scalar_lea.vmem %s11, %s748
        %p750 = pneg %p301
        %p751 = pneg %p298
        %p752 = scmp.lt.s32.totalorder %s34, 1
        %s753 = scalar_select %p752, %s34, 1
        %s754 = scalar_lea.vmem %s12, %s753
        %p755 = pneg %p327
        %p756 = pneg %p324
        %p757 = scmp.lt.s32.totalorder %s34, 1
        %s758 = scalar_select %p757, %s34, 1
        %s759 = smul.addr %s758, 2
        %s760 = scalar_lea.vmem %s13, %s759
        %p761 = pneg %p353
        %p762 = pneg %p350
        %p763 = scmp.lt.s32.totalorder %s34, 1
        %s764 = scalar_select %p763, %s34, 1
        %s765 = smul.addr %s764, 2
        %s766 = smul.addr %s765, 4
        %s767 = scalar_lea.vmem %s14, %s766
        %p768 = pneg %p379
        %p769 = pneg %p376
        %p770 = scmp.lt.s32.totalorder %s34, 1
        %s771 = scalar_select %p770, %s34, 1
        %s772 = smul.addr %s771, 2
        %s773 = smul.addr %s772, 8
        %s774 = scalar_lea.vmem %s15, %s773
        %p775 = pneg %p405
        %p776 = pneg %p402
        %p777 = scmp.lt.s32.totalorder %s34, 1
        %s778 = scalar_select %p777, %s34, 1
        %s779 = smul.addr %s778, 16
        %s780 = smul.addr %s779, 4
        %s781 = scalar_lea.vmem %s16, %s780
        %p782 = pneg %p431
        %p783 = pneg %p428
        %p784 = scmp.lt.s32.totalorder %s34, 1
        %s785 = scalar_select %p784, %s34, 1
        %s786 = scalar_lea.vmem %s17, %s785
        %p787 = pneg %p457
        %p788 = pneg %p454
        %p789 = scmp.lt.s32.totalorder %s34, 1
        %s790 = scalar_select %p789, %s34, 1
        %s791 = smul.addr %s790, 2
        %s792 = smul.addr %s791, 4
        %s793 = scalar_lea.vmem %s18, %s792
        %p794 = pneg %p483
        %p795 = pneg %p480
        %p796 = scmp.lt.s32.totalorder %s34, 1
        %s797 = scalar_select %p796, %s34, 1
        %s798 = smul.addr %s797, 2
        %s799 = smul.addr %s798, 8
        %s800 = scalar_lea.vmem %s19, %s799
        %p801 = pneg %p509
        %p802 = pneg %p506
        %p803 = pneg %p530
        %p804 = pneg %p527
        %p805 = scmp.lt.s32.totalorder %s34, 1
        %s806 = scalar_select %p805, %s34, 1
        %s807 = smul.addr %s806, 2
        %s808 = smul.addr %s807, 8
        %s809 = scalar_lea.vmem %s8, %s808
        %p810 = scmp.lt.s32.totalorder %s34, 1
        %s811 = scalar_select %p810, %s34, 1
        %s812 = smul.addr %s811, 2
        %s813 = smul.addr %s812, 8
        %s814 = scalar_lea.vmem %s9, %s813
        %p815 = scmp.lt.s32.totalorder %s34, 1
        %s816 = scalar_select %p815, %s34, 1
        %s817 = smul.addr %s816, 4
        %s818 = smul.addr %s817, 8
        %s819 = scalar_lea.vmem %s10, %s818
        %p820 = scmp.lt.s32.totalorder %s34, 1
        %s821 = scalar_select %p820, %s34, 1
        %s822 = smul.addr %s821, 2
        %s823 = smul.addr %s822, 8
        %s824 = scalar_lea.vmem %s11, %s823
        %p825 = scmp.lt.s32.totalorder %s34, 1
        %s826 = scalar_select %p825, %s34, 1
        %s827 = scalar_lea.vmem %s12, %s826
        %p828 = scmp.lt.s32.totalorder %s34, 1
        %s829 = scalar_select %p828, %s34, 1
        %s830 = smul.addr %s829, 2
        %s831 = scalar_lea.vmem %s13, %s830
        %p832 = scmp.lt.s32.totalorder %s34, 1
        %s833 = scalar_select %p832, %s34, 1
        %s834 = smul.addr %s833, 2
        %s835 = smul.addr %s834, 4
        %s836 = scalar_lea.vmem %s14, %s835
        %p837 = scmp.lt.s32.totalorder %s34, 1
        %s838 = scalar_select %p837, %s34, 1
        %s839 = smul.addr %s838, 2
        %s840 = smul.addr %s839, 8
        %s841 = scalar_lea.vmem %s15, %s840
        %p842 = scmp.lt.s32.totalorder %s34, 1
        %s843 = scalar_select %p842, %s34, 1
        %s844 = smul.addr %s843, 16
        %s845 = smul.addr %s844, 4
        %s846 = scalar_lea.vmem %s16, %s845
        %p847 = scmp.lt.s32.totalorder %s34, 1
        %s848 = scalar_select %p847, %s34, 1
        %s849 = scalar_lea.vmem %s17, %s848
        %p850 = scmp.lt.s32.totalorder %s34, 1
        %s851 = scalar_select %p850, %s34, 1
        %s852 = smul.addr %s851, 2
        %s853 = smul.addr %s852, 4
        %s854 = scalar_lea.vmem %s18, %s853
        %p855 = scmp.lt.s32.totalorder %s34, 1
        %s856 = scalar_select %p855, %s34, 1
        %s857 = smul.addr %s856, 2
        %s858 = smul.addr %s857, 8
        %s859 = scalar_lea.vmem %s19, %s858
        %v861 = vlaneseq
        %v862 = vand.u32 %v861, 127
        %vm863 = vcmp.lt.s32.totalorder %v862, 16
        %p864 = scmp.eq.s32.totalorder %s34, 0
        // Predicated region
        $region113: #{tpu_custom_call.1} parent=99 // pred_check
          %p865 = pneg %p864
        $region114: #{tpu_custom_call.1} parent=99 // pred_check_branch
          %867 = sbr.rel (%p865) target = $region116
        $region115: #{tpu_custom_call.1} parent=99 // pred_region
          %868 = vst [vmem:[#allocation2] sm:$0xff] 0.0
          %869 = vst [vmem:[#allocation2 + $0x8] sm:$0xff] 0.0
          %870 = vst [vmem:[#allocation2 + $0x10] sm:$0xff] 0.0
          %871 = vst [vmem:[#allocation2 + $0x18] sm:$0xff] 0.0
          %v872 = vld [vmem:[%s3] sm:$0xff]
          %v873 = vld [vmem:[%s3 + $0x8] sm:$0xff]
          %v874 = vld [vmem:[%s3 + $0x10] sm:$0xff]
          %v875 = vld [vmem:[%s3 + $0x18] sm:$0xff]
          %vm876 = vcmask 130048
          %877 = vst.msk [vmem:[#allocation2] sm:$0xff] %vm876, %v872
          %878 = vst.msk [vmem:[#allocation2 + $0x8] sm:$0xff] %vm876, %v873
          %879 = vst.msk [vmem:[#allocation2 + $0x10] sm:$0xff] %vm876, %v874
          %880 = vst.msk [vmem:[#allocation2 + $0x18] sm:$0xff] %vm876, %v875
          %v881 = vld [vmem:[#allocation2] sm:$0xff]
          %v882 = vld [vmem:[#allocation2 + $0x8] sm:$0xff]
          %v883 = vld [vmem:[#allocation2 + $0x10] sm:$0xff]
          %v884 = vld [vmem:[#allocation2 + $0x18] sm:$0xff]
          %885 = vrot.lane.b32.xlu0 %v881, 1
          %v886 = vpop.permute.xlu0 %885
          %887 = vrot.lane.b32.xlu0 %v882, 1
          %v888 = vpop.permute.xlu0 %887
          %889 = vrot.lane.b32.xlu0 %v883, 1
          %v890 = vpop.permute.xlu0 %889
          %891 = vrot.lane.b32.xlu0 %v884, 1
          %v892 = vpop.permute.xlu0 %891
          %893 = vrot.lane.b32.xlu0 %v881, 127
          %v894 = vpop.permute.xlu0 %893
          %895 = vrot.lane.b32.xlu0 %v882, 127
          %v896 = vpop.permute.xlu0 %895
          %897 = vrot.lane.b32.xlu0 %v883, 127
          %v898 = vpop.permute.xlu0 %897
          %899 = vrot.lane.b32.xlu0 %v884, 127
          %v900 = vpop.permute.xlu0 %899
          %v901 = vld [vmem:[%s4] sm:$0xf]
          %v902 = vld [vmem:[%s4 + $0x4] sm:$0xf]
          %v903 = vld [vmem:[%s5] sm:$0xff]
          %v904 = vld [vmem:[%s5 + $0x8] sm:$0xff]
          %v905 = vpack.c.bf16 %v888, %v886
          %v906 = vpack.c.bf16 %v892, %v890
          %v907 = vpack.c.bf16 %v882, %v881
          %v908 = vpack.c.bf16 %v884, %v883
          %v909 = vpack.c.bf16 %v896, %v894
          %v910 = vpack.c.bf16 %v900, %v898
          %912 = vset.pattern.permute.xlu0 0
          %913 = vperm.xlu0 %912, %v903
          %v914 = vpop.permute.xlu0 %913
          %917 = vset.pattern.permute.xlu0 0
          %918 = vperm.xlu0 %917, %v904
          %v919 = vpop.permute.xlu0 %918
          %v923 = vunpack.c.l.b16 %v901
          %v924 = vunpack.c.l.b16 %v902
          %v925 = vpack.c.b16 %v924, %v923
          %vm926 = vcmask 392192
          %v928 = vsel %vm926, %v925, 0
          %930 = vmatprep.subr.bf16.mxu0 0
          %931 = vmatpush1.bf16.msra.mxu0 0
          %932 = vmatprep.subr.bf16.mxu0 0
          %933 = vmatpush1.bf16.msra.mxu0 0
          %934 = vmatprep.subr.bf16.mxu0 0
          %935 = vmatpush1.bf16.msra.mxu0 0
          %936 = vmatprep.subr.bf16.mxu0 0
          %937 = vmatpush1.bf16.msra.mxu0 0
          %938 = vmatprep.subr.bf16.mxu0 0
          %939 = vmatpush1.bf16.msra.mxu0 0
          %940 = vmatprep.subr.bf16.mxu0 %v910
          %941 = vmatpush1.bf16.msra.mxu0 %v909
          %942 = vmatprep.subr.bf16.mxu0 %v908
          %943 = vmatpush1.bf16.msra.mxu0 %v907
          %944 = vmatprep.subr.bf16.mxu0 %v906
          %945 = vmatpush1.bf16.msra.mxu0 %v905
          %946 = vmatprep.subr.bf16.mxu0 0
          %947 = vmatpush2.bf16.msra.mxu0 0
          %948 = vmatprep.subr.bf16.mxu0 0
          %949 = vmatpush2.bf16.msra.mxu0 0
          %950 = vmatprep.subr.bf16.mxu0 0
          %951 = vmatpush2.bf16.msra.mxu0 0
          %952 = vmatprep.subr.bf16.mxu0 0
          %953 = vmatpush2.bf16.msra.mxu0 0
          %954 = vmatprep.subr.bf16.mxu0 0
          %955 = vmatpush2.bf16.msra.mxu0 0
          %956 = vmatprep.subr.bf16.mxu0 0
          %957 = vmatpush2.bf16.msra.mxu0 0
          %958 = vmatprep.subr.bf16.mxu0 0
          %959 = vmatpush2.bf16.msra.mxu0 0
          %960 = vmatprep.subr.bf16.mxu0 0
          %961 = vmatpush2.bf16.msra.mxu0 0
          %962 = vmatprep.mubr.bf16.mxu0 0
          %963 = vmatmul.mubr.bf16.gmra.mxu0 %v928
          %v964 = vpop.f32.mrf.mxu0
          %v965 = vadd.f32 %v914, %v964
          %v966 = vpop.f32.mrf.mxu0
          %v967 = vadd.f32 %v914, %v966
          %v968 = vpop.f32.mrf.mxu0
          %v969 = vadd.f32 %v919, %v968
          %v970 = vpop.f32.mrf.mxu0
          %v971 = vadd.f32 %v919, %v970
          %972 = vdwg.mxu0
          %v973 = vsel %vm863, 1, 0
          %vm974 = vcmp.eq.s32.totalorder %v973, 1
          %v975 = vsel %vm974, %v965, 0.0
          %v976 = vsel %vm974, %v969, 0.0
          %v977 = vsel %vm974, %v967, 0.0
          %v978 = vsel %vm974, %v971, 0.0
          %v979 = vld [vmem:[%s6] sm:$0xff]
          %v980 = vld [vmem:[%s6 + $0x8] sm:$0xff]
          %v981 = vld [vmem:[%s7] sm:$0xff]
          %v982 = vld [vmem:[%s7 + $0x8] sm:$0xff]
          %v983 = vadd.f32 %v975, %v977
          %984 = vadd.xlane.f32.xlu0 %v983
          %v985 = vpop.xlane.xlu0 %984
          %v986 = vadd.f32 %v976, %v978
          %987 = vadd.xlane.f32.xlu0 %v986
          %v988 = vpop.xlane.xlu0 %987
          %v989 = vrcp.pop 32.0
          %v990 = vmul.f32 %v985, %v989
          %v991 = vmul.f32 %v988, %v989
          %v992 = vsub.f32 %v975, %v990
          %v993 = vsub.f32 %v976, %v991
          %v994 = vsub.f32 %v977, %v990
          %v995 = vsub.f32 %v978, %v991
          %v996 = vsel %vm974, %v992, 0.0
          %v997 = vsel %vm974, %v993, 0.0
          %v998 = vsel %vm974, %v994, 0.0
          %v999 = vsel %vm974, %v995, 0.0
          %v1000 = vmul.f32 %v996, %v996
          %v1001 = vmul.f32 %v997, %v997
          %v1002 = vmul.f32 %v998, %v998
          %v1003 = vmul.f32 %v999, %v999
          %v1004 = vadd.f32 %v1000, %v1002
          %1005 = vadd.xlane.f32.xlu0 %v1004
          %v1006 = vpop.xlane.xlu0 %1005
          %v1007 = vadd.f32 %v1001, %v1003
          %1008 = vadd.xlane.f32.xlu0 %v1007
          %v1009 = vpop.xlane.xlu0 %1008
          %v1010 = vmul.f32 %v1006, %v989
          %v1011 = vmul.f32 %v1009, %v989
          %v1012 = vadd.f32 %v1010, 1e-05
          %v1013 = vadd.f32 %v1011, 1e-05
          %v1014 = vrsqrt.pop %v1012
          %v1015 = vrsqrt.pop %v1013
          %v1016 = vmul.f32 %v996, %v1014
          %v1017 = vmul.f32 %v997, %v1015
          %v1018 = vmul.f32 %v998, %v1014
          %v1019 = vmul.f32 %v999, %v1015
          %1021 = vset.pattern.permute.xlu0 0
          %1022 = vperm.xlu0 %1021, %v979
          %v1023 = vpop.permute.xlu0 %1022
          %1026 = vset.pattern.permute.xlu0 0
          %1027 = vperm.xlu0 %1026, %v980
          %v1028 = vpop.permute.xlu0 %1027
          %v1030 = vmul.f32 %v1016, %v1023
          %v1031 = vmul.f32 %v1017, %v1028
          %v1032 = vmul.f32 %v1018, %v1023
          %v1033 = vmul.f32 %v1019, %v1028
          %1035 = vset.pattern.permute.xlu0 0
          %1036 = vperm.xlu0 %1035, %v981
          %v1037 = vpop.permute.xlu0 %1036
          %1040 = vset.pattern.permute.xlu0 0
          %1041 = vperm.xlu0 %1040, %v982
          %v1042 = vpop.permute.xlu0 %1041
          %v1044 = vsel %vm974, %v1037, 0.0
          %v1045 = vsel %vm974, %v1042, 0.0
          %v1046 = vadd.f32 %v1030, %v1044
          %v1047 = vadd.f32 %v1031, %v1045
          %v1048 = vadd.f32 %v1032, %v1044
          %v1049 = vadd.f32 %v1033, %v1045
          %1050 = vst [vmem:[#allocation2] sm:$0xff] %v1046
          %1051 = vst [vmem:[#allocation2 + $0x8] sm:$0xff] %v1047
          %1052 = vst [vmem:[#allocation2 + $0x10] sm:$0xff] %v1048
          %1053 = vst [vmem:[#allocation2 + $0x18] sm:$0xff] %v1049
        $region116: #{tpu_custom_call.1} parent=99 // pred_fallthru
          _
        %v1054 = vld [vmem:[#allocation2] sm:$0xff]
        %v1055 = vld [vmem:[#allocation2 + $0x8] sm:$0xff]
        %v1056 = vld [vmem:[#allocation2 + $0x10] sm:$0xff]
        %v1057 = vld [vmem:[#allocation2 + $0x18] sm:$0xff]
        %s1058 = sld [smem:[#allocation3 + %s34]]
        %s1059 = scvt.s32.f32 %s1058
        %v1060 = vstv %s1058
        %vm1061 = vcmp.lt.s32.totalorder %v862, %v1060
        %v1062 = vld [vmem:[%s809] sm:$0xff]
        %v1063 = vld [vmem:[%s809 + $0x8] sm:$0xff]
        %v1064 = vld [vmem:[%s814] sm:$0xff]
        %v1065 = vld [vmem:[%s814 + $0x8] sm:$0xff]
        %v1066 = vadd.f32 %v1054, %v1056
        %1067 = vadd.xlane.f32.xlu0 %v1066
        %v1068 = vpop.xlane.xlu0 %1067
        %v1069 = vadd.f32 %v1055, %v1057
        %1070 = vadd.xlane.f32.xlu0 %v1069
        %v1071 = vpop.xlane.xlu0 %1070
        %v1072 = vrcp.pop 32.0
        %v1073 = vmul.f32 %v1068, %v1072
        %v1074 = vmul.f32 %v1071, %v1072
        %v1075 = vsub.f32 %v1054, %v1073
        %v1076 = vsub.f32 %v1055, %v1074
        %v1077 = vsub.f32 %v1056, %v1073
        %v1078 = vsub.f32 %v1057, %v1074
        %v1079 = vsel %vm863, 1, 0
        %vm1080 = vcmp.eq.s32.totalorder %v1079, 1
        %v1081 = vsel %vm1080, %v1075, 0.0
        %v1082 = vsel %vm1080, %v1076, 0.0
        %v1083 = vsel %vm1080, %v1077, 0.0
        %v1084 = vsel %vm1080, %v1078, 0.0
        %v1085 = vmul.f32 %v1081, %v1081
        %v1086 = vmul.f32 %v1082, %v1082
        %v1087 = vmul.f32 %v1083, %v1083
        %v1088 = vmul.f32 %v1084, %v1084
        %v1089 = vadd.f32 %v1085, %v1087
        %1090 = vadd.xlane.f32.xlu0 %v1089
        %v1091 = vpop.xlane.xlu0 %1090
        %v1092 = vadd.f32 %v1086, %v1088
        %1093 = vadd.xlane.f32.xlu0 %v1092
        %v1094 = vpop.xlane.xlu0 %1093
        %v1095 = vmul.f32 %v1091, %v1072
        %v1096 = vmul.f32 %v1094, %v1072
        %v1097 = vadd.f32 %v1095, 1e-05
        %v1098 = vadd.f32 %v1096, 1e-05
        %v1099 = vrsqrt.pop %v1097
        %v1100 = vrsqrt.pop %v1098
        %v1101 = vmul.f32 %v1081, %v1099
        %v1102 = vmul.f32 %v1082, %v1100
        %v1103 = vmul.f32 %v1083, %v1099
        %v1104 = vmul.f32 %v1084, %v1100
        %1106 = vset.pattern.permute.xlu0 0
        %1107 = vperm.xlu0 %1106, %v1062
        %v1108 = vpop.permute.xlu0 %1107
        %1111 = vset.pattern.permute.xlu0 0
        %1112 = vperm.xlu0 %1111, %v1063
        %v1113 = vpop.permute.xlu0 %1112
        %v1115 = vmul.f32 %v1101, %v1108
        %v1116 = vmul.f32 %v1102, %v1113
        %v1117 = vmul.f32 %v1103, %v1108
        %v1118 = vmul.f32 %v1104, %v1113
        %1120 = vset.pattern.permute.xlu0 0
        %1121 = vperm.xlu0 %1120, %v1064
        %v1122 = vpop.permute.xlu0 %1121
        %1125 = vset.pattern.permute.xlu0 0
        %1126 = vperm.xlu0 %1125, %v1065
        %v1127 = vpop.permute.xlu0 %1126
        %v1129 = vsel %vm1080, %v1122, 0.0
        %v1130 = vsel %vm1080, %v1127, 0.0
        %v1131 = vadd.f32 %v1115, %v1129
        %v1132 = vadd.f32 %v1116, %v1130
        %v1133 = vadd.f32 %v1117, %v1129
        %v1134 = vadd.f32 %v1118, %v1130
        %v1135 = vld [vmem:[%s819] sm:$0xff]
        %v1136 = vld [vmem:[%s819 + $0x8] sm:$0xff]
        %v1137 = vld [vmem:[%s819 + $0x10] sm:$0xff]
        %v1138 = vld [vmem:[%s819 + $0x18] sm:$0xff]
        %1140 = vset.pattern.permute.xlu0 0
        %1141 = vperm.xlu0 %1140, %v1137
        %v1142 = vpop.permute.xlu0 %1141
        %1145 = vset.pattern.permute.xlu0 0
        %1146 = vperm.xlu0 %1145, %v1138
        %v1147 = vpop.permute.xlu0 %1146
        %v1149 = vmul.f32 %v1131, %v1142
        %v1150 = vmul.f32 %v1132, %v1147
        %v1151 = vmul.f32 %v1133, %v1142
        %v1152 = vmul.f32 %v1134, %v1147
        %s1153 = scalar_select %p864, 1, 0
        %s1154 = scvt.s32.f32 %s1153
        %1155 = vrot.lane.b32.xlu0 %v1131, 1
        %v1156 = vpop.permute.xlu0 %1155
        %1157 = vrot.lane.b32.xlu0 %v1132, 1
        %v1158 = vpop.permute.xlu0 %1157
        %1159 = vrot.lane.b32.xlu0 %v1133, 1
        %v1160 = vpop.permute.xlu0 %1159
        %1161 = vrot.lane.b32.xlu0 %v1134, 1
        %v1162 = vpop.permute.xlu0 %1161
        %v1163 = vstv %s1154
        %v1164 = vmul.f32 %v1163, %v1156
        %v1165 = vmul.f32 %v1163, %v1158
        %v1166 = vmul.f32 %v1163, %v1160
        %v1167 = vmul.f32 %v1163, %v1162
        %v1168 = vadd.f32 %v1164, 0.0
        %v1169 = vadd.f32 %v1165, 0.0
        %v1170 = vadd.f32 %v1166, 0.0
        %v1171 = vadd.f32 %v1167, 0.0
        %p1172 = scmp.eq.s32.totalorder %s34, 1
        %s1173 = scalar_select %p1172, 1, 0
        %s1174 = scvt.s32.f32 %s1173
        %1175 = vrot.lane.b32.xlu0 %v1131, 2
        %v1176 = vpop.permute.xlu0 %1175
        %1177 = vrot.lane.b32.xlu0 %v1132, 2
        %v1178 = vpop.permute.xlu0 %1177
        %1179 = vrot.lane.b32.xlu0 %v1133, 2
        %v1180 = vpop.permute.xlu0 %1179
        %1181 = vrot.lane.b32.xlu0 %v1134, 2
        %v1182 = vpop.permute.xlu0 %1181
        %v1183 = vstv %s1174
        %v1184 = vmul.f32 %v1183, %v1176
        %v1185 = vmul.f32 %v1183, %v1178
        %v1186 = vmul.f32 %v1183, %v1180
        %v1187 = vmul.f32 %v1183, %v1182
        %v1188 = vadd.f32 %v1168, %v1184
        %v1189 = vadd.f32 %v1169, %v1185
        %v1190 = vadd.f32 %v1170, %v1186
        %v1191 = vadd.f32 %v1171, %v1187
        %1193 = vset.pattern.permute.xlu0 0
        %1194 = vperm.xlu0 %1193, %v1135
        %v1195 = vpop.permute.xlu0 %1194
        %1198 = vset.pattern.permute.xlu0 0
        %1199 = vperm.xlu0 %1198, %v1136
        %v1200 = vpop.permute.xlu0 %1199
        %v1202 = vmul.f32 %v1188, %v1195
        %v1203 = vmul.f32 %v1189, %v1200
        %v1204 = vmul.f32 %v1190, %v1195
        %v1205 = vmul.f32 %v1191, %v1200
        %v1206 = vadd.f32 %v1149, %v1202
        %v1207 = vadd.f32 %v1150, %v1203
        %v1208 = vadd.f32 %v1151, %v1204
        %v1209 = vadd.f32 %v1152, %v1205
        %v1210 = vld [vmem:[%s824] sm:$0xff]
        %v1211 = vld [vmem:[%s824 + $0x8] sm:$0xff]
        %1213 = vset.pattern.permute.xlu0 0
        %1214 = vperm.xlu0 %1213, %v1210
        %v1215 = vpop.permute.xlu0 %1214
        %1218 = vset.pattern.permute.xlu0 0
        %1219 = vperm.xlu0 %1218, %v1211
        %v1220 = vpop.permute.xlu0 %1219
        %v1222 = vadd.f32 %v1206, %v1215
        %v1223 = vadd.f32 %v1207, %v1220
        %v1224 = vadd.f32 %v1208, %v1215
        %v1225 = vadd.f32 %v1209, %v1220
        %vm1226 = vcmp.gt.f32.partialorder %v1222, 0.0
        %vm1227 = vcmp.gt.f32.partialorder %v1223, 0.0
        %vm1228 = vcmp.gt.f32.partialorder %v1224, 0.0
        %vm1229 = vcmp.gt.f32.partialorder %v1225, 0.0
        %v1230 = vmul.f32 %v1222, 1.442695
        %v1231 = vpow.pop %v1230
        %v1232 = vmul.f32 %v1223, 1.442695
        %v1233 = vpow.pop %v1232
        %v1234 = vmul.f32 %v1224, 1.442695
        %v1235 = vpow.pop %v1234
        %v1236 = vmul.f32 %v1225, 1.442695
        %v1237 = vpow.pop %v1236
        %v1238 = vsub.f32 %v1231, 1.0
        %v1239 = vsub.f32 %v1233, 1.0
        %v1240 = vsub.f32 %v1235, 1.0
        %v1241 = vsub.f32 %v1237, 1.0
        %v1242 = vmul.f32 %v1238, 1.6732632
        %v1243 = vmul.f32 %v1239, 1.6732632
        %v1244 = vmul.f32 %v1240, 1.6732632
        %v1245 = vmul.f32 %v1241, 1.6732632
        %v1246 = vsel %vm1226, %v1222, %v1242
        %v1247 = vsel %vm1227, %v1223, %v1243
        %v1248 = vsel %vm1228, %v1224, %v1244
        %v1249 = vsel %vm1229, %v1225, %v1245
        %v1250 = vmul.f32 %v1246, 1.050701
        %v1251 = vmul.f32 %v1247, 1.050701
        %v1252 = vmul.f32 %v1248, 1.050701
        %v1253 = vmul.f32 %v1249, 1.050701
        %v1254 = vsel %vm1061, 1, 0
        %vm1255 = vcmp.eq.s32.totalorder %v1254, 1
        %v1256 = vsel %vm1255, %v1250, 0.0
        %v1257 = vsel %vm1255, %v1251, 0.0
        %v1258 = vsel %vm1255, %v1252, 0.0
        %v1259 = vsel %vm1255, %v1253, 0.0
        %v1260 = vstv %s1059
        %v1261 = vrcp.pop %v1260
        %s1262 = vtos %v1261
        %1263 = vadd.xlane.f32.xlu0 %v1256
        %v1264 = vpop.xlane.xlu0 %1263
        %1265 = vadd.xlane.f32.xlu0 %v1257
        %v1266 = vpop.xlane.xlu0 %1265
        %1267 = vadd.xlane.f32.xlu0 %v1258
        %v1268 = vpop.xlane.xlu0 %1267
        %1269 = vadd.xlane.f32.xlu0 %v1259
        %v1270 = vpop.xlane.xlu0 %1269
        %v1271 = vstv %s1262
        %v1272 = vmul.f32 %v1264, %v1271
        %v1273 = vmul.f32 %v1266, %v1271
        %v1274 = vmul.f32 %v1268, %v1271
        %v1275 = vmul.f32 %v1270, %v1271
        %v1276 = vsel %vm1255, %v1250, -3.4028235e+38
        %v1277 = vsel %vm1255, %v1251, -3.4028235e+38
        %v1278 = vsel %vm1255, %v1252, -3.4028235e+38
        %v1279 = vsel %vm1255, %v1253, -3.4028235e+38
        %1280 = vmax.xlane.f32.xlu0 %v1276
        %v1281 = vpop.xlane.xlu0 %1280
        %1282 = vmax.xlane.f32.xlu0 %v1277
        %v1283 = vpop.xlane.xlu0 %1282
        %1284 = vmax.xlane.f32.xlu0 %v1278
        %v1285 = vpop.xlane.xlu0 %1284
        %1286 = vmax.xlane.f32.xlu0 %v1279
        %v1287 = vpop.xlane.xlu0 %1286
        %v1288 = vld [vmem:[%s827] sm:$0x1]
        %v1289 = vld [vmem:[%s831] sm:$0x3]
        %v1290 = vld [vmem:[%s836] sm:$0xf]
        %v1291 = vld [vmem:[%s836 + $0x4] sm:$0xf]
        %v1292 = vld [vmem:[%s841] sm:$0xff]
        %v1293 = vld [vmem:[%s841 + $0x8] sm:$0xff]
        %v1294 = vpack.c.bf16 %v1273, %v1272
        %vm1295 = vcmask 130048
        %v1297 = vsel %vm1295, %v1288, 0
        %1299 = vmatprep.subr.bf16.mxu0 0
        %1300 = vmatpush1.bf16.msra.mxu0 0
        %1301 = vmatprep.subr.bf16.mxu0 0
        %1302 = vmatpush1.bf16.msra.mxu0 0
        %1303 = vmatprep.subr.bf16.mxu0 0
        %1304 = vmatpush1.bf16.msra.mxu0 0
        %1305 = vmatprep.subr.bf16.mxu0 0
        %1306 = vmatpush1.bf16.msra.mxu0 0
        %1307 = vmatprep.subr.bf16.mxu0 0
        %1308 = vmatpush1.bf16.msra.mxu0 0
        %1309 = vmatprep.subr.bf16.mxu0 0
        %1310 = vmatpush1.bf16.msra.mxu0 0
        %1311 = vmatprep.subr.bf16.mxu0 0
        %1312 = vmatpush1.bf16.msra.mxu0 0
        %1313 = vmatprep.subr.bf16.mxu0 0
        %1314 = vmatpush1.bf16.msra.mxu0 %v1294
        %1315 = vmatprep.subr.bf16.mxu0 0
        %1316 = vmatpush2.bf16.msra.mxu0 0
        %1317 = vmatprep.subr.bf16.mxu0 0
        %1318 = vmatpush2.bf16.msra.mxu0 0
        %1319 = vmatprep.subr.bf16.mxu0 0
        %1320 = vmatpush2.bf16.msra.mxu0 0
        %1321 = vmatprep.subr.bf16.mxu0 0
        %1322 = vmatpush2.bf16.msra.mxu0 0
        %1323 = vmatprep.subr.bf16.mxu0 0
        %1324 = vmatpush2.bf16.msra.mxu0 0
        %1325 = vmatprep.subr.bf16.mxu0 0
        %1326 = vmatpush2.bf16.msra.mxu0 0
        %1327 = vmatprep.subr.bf16.mxu0 0
        %1328 = vmatpush2.bf16.msra.mxu0 0
        %1329 = vmatprep.subr.bf16.mxu0 0
        %1330 = vmatpush2.bf16.msra.mxu0 0
        %1331 = vmatprep.mubr.bf16.mxu0 0
        %1332 = vmatmul.mubr.bf16.gmra.mxu0 %v1297
        %v1333 = vpop.f32.mrf.mxu0
        %v1334 = vadd.f32 %v1289, %v1333
        %v1335 = vpop.f32.mrf.mxu0
        %v1336 = vpop.f32.mrf.mxu0
        %v1337 = vpop.f32.mrf.mxu0
        %1338 = vdwg.mxu0
        %v1339 = vmax.f32 %v1334, 0.0
        %v1340 = vpack.c.bf16 %v1339, %v1339
        %v1343 = vunpack.c.l.b16 %v1290
        %v1344 = vunpack.c.l.b16 %v1291
        %v1345 = vpack.c.b16 %v1344, %v1343
        %vm1346 = vcmask 15360
        %v1348 = vsel %vm1346, %v1345, 0
        %vm1350 = vcmask 1040384
        %v1352 = vsel %vm1350, %v1340, 0
        %1354 = vmatprep.subr.bf16.mxu0 0
        %1355 = vmatpush1.bf16.msra.mxu0 0
        %1356 = vmatprep.subr.bf16.mxu0 0
        %1357 = vmatpush1.bf16.msra.mxu0 0
        %1358 = vmatprep.subr.bf16.mxu0 0
        %1359 = vmatpush1.bf16.msra.mxu0 0
        %1360 = vmatprep.subr.bf16.mxu0 0
        %1361 = vmatpush1.bf16.msra.mxu0 0
        %1362 = vmatprep.subr.bf16.mxu0 0
        %1363 = vmatpush1.bf16.msra.mxu0 0
        %1364 = vmatprep.subr.bf16.mxu0 0
        %1365 = vmatpush1.bf16.msra.mxu0 0
        %1366 = vmatprep.subr.bf16.mxu0 0
        %1367 = vmatpush1.bf16.msra.mxu0 0
        %1368 = vmatprep.subr.bf16.mxu0 0
        %1369 = vmatpush1.bf16.msra.mxu0 %v1352
        %1370 = vmatprep.subr.bf16.mxu0 0
        %1371 = vmatpush2.bf16.msra.mxu0 0
        %1372 = vmatprep.subr.bf16.mxu0 0
        %1373 = vmatpush2.bf16.msra.mxu0 0
        %1374 = vmatprep.subr.bf16.mxu0 0
        %1375 = vmatpush2.bf16.msra.mxu0 0
        %1376 = vmatprep.subr.bf16.mxu0 0
        %1377 = vmatpush2.bf16.msra.mxu0 0
        %1378 = vmatprep.subr.bf16.mxu0 0
        %1379 = vmatpush2.bf16.msra.mxu0 0
        %1380 = vmatprep.subr.bf16.mxu0 0
        %1381 = vmatpush2.bf16.msra.mxu0 0
        %1382 = vmatprep.subr.bf16.mxu0 0
        %1383 = vmatpush2.bf16.msra.mxu0 0
        %1384 = vmatprep.subr.bf16.mxu0 0
        %1385 = vmatpush2.bf16.msra.mxu0 0
        %1386 = vmatprep.mubr.bf16.mxu0 0
        %1387 = vmatmul.mubr.bf16.gmra.mxu0 %v1348
        %v1388 = vpop.f32.mrf.mxu0
        %v1389 = vadd.f32 %v1292, %v1388
        %v1390 = vpop.f32.mrf.mxu0
        %v1391 = vpop.f32.mrf.mxu0
        %v1392 = vadd.f32 %v1293, %v1391
        %v1393 = vpop.f32.mrf.mxu0
        %1394 = vdwg.mxu0
        %v1395 = vpack.c.bf16 %v1283, %v1281
        %1396 = vmatprep.subr.bf16.mxu0 0
        %1397 = vmatpush1.bf16.msra.mxu0 0
        %1398 = vmatprep.subr.bf16.mxu0 0
        %1399 = vmatpush1.bf16.msra.mxu0 0
        %1400 = vmatprep.subr.bf16.mxu0 0
        %1401 = vmatpush1.bf16.msra.mxu0 0
        %1402 = vmatprep.subr.bf16.mxu0 0
        %1403 = vmatpush1.bf16.msra.mxu0 0
        %1404 = vmatprep.subr.bf16.mxu0 0
        %1405 = vmatpush1.bf16.msra.mxu0 0
        %1406 = vmatprep.subr.bf16.mxu0 0
        %1407 = vmatpush1.bf16.msra.mxu0 0
        %1408 = vmatprep.subr.bf16.mxu0 0
        %1409 = vmatpush1.bf16.msra.mxu0 0
        %1410 = vmatprep.subr.bf16.mxu0 0
        %1411 = vmatpush1.bf16.msra.mxu0 %v1395
        %1412 = vmatprep.subr.bf16.mxu0 0
        %1413 = vmatpush2.bf16.msra.mxu0 0
        %1414 = vmatprep.subr.bf16.mxu0 0
        %1415 = vmatpush2.bf16.msra.mxu0 0
        %1416 = vmatprep.subr.bf16.mxu0 0
        %1417 = vmatpush2.bf16.msra.mxu0 0
        %1418 = vmatprep.subr.bf16.mxu0 0
        %1419 = vmatpush2.bf16.msra.mxu0 0
        %1420 = vmatprep.subr.bf16.mxu0 0
        %1421 = vmatpush2.bf16.msra.mxu0 0
        %1422 = vmatprep.subr.bf16.mxu0 0
        %1423 = vmatpush2.bf16.msra.mxu0 0
        %1424 = vmatprep.subr.bf16.mxu0 0
        %1425 = vmatpush2.bf16.msra.mxu0 0
        %1426 = vmatprep.subr.bf16.mxu0 0
        %1427 = vmatpush2.bf16.msra.mxu0 0
        %1428 = vmatprep.mubr.bf16.mxu0 0
        %1429 = vmatmul.mubr.bf16.gmra.mxu0 %v1297
        %v1430 = vpop.f32.mrf.mxu0
        %v1431 = vadd.f32 %v1289, %v1430
        %v1432 = vpop.f32.mrf.mxu0
        %v1433 = vpop.f32.mrf.mxu0
        %v1434 = vpop.f32.mrf.mxu0
        %1435 = vdwg.mxu0
        %v1436 = vmax.f32 %v1431, 0.0
        %v1437 = vpack.c.bf16 %v1436, %v1436
        %v1439 = vsel %vm1350, %v1437, 0
        %1441 = vmatprep.subr.bf16.mxu0 0
        %1442 = vmatpush1.bf16.msra.mxu0 0
        %1443 = vmatprep.subr.bf16.mxu0 0
        %1444 = vmatpush1.bf16.msra.mxu0 0
        %1445 = vmatprep.subr.bf16.mxu0 0
        %1446 = vmatpush1.bf16.msra.mxu0 0
        %1447 = vmatprep.subr.bf16.mxu0 0
        %1448 = vmatpush1.bf16.msra.mxu0 0
        %1449 = vmatprep.subr.bf16.mxu0 0
        %1450 = vmatpush1.bf16.msra.mxu0 0
        %1451 = vmatprep.subr.bf16.mxu0 0
        %1452 = vmatpush1.bf16.msra.mxu0 0
        %1453 = vmatprep.subr.bf16.mxu0 0
        %1454 = vmatpush1.bf16.msra.mxu0 0
        %1455 = vmatprep.subr.bf16.mxu0 0
        %1456 = vmatpush1.bf16.msra.mxu0 %v1439
        %1457 = vmatprep.subr.bf16.mxu0 0
        %1458 = vmatpush2.bf16.msra.mxu0 0
        %1459 = vmatprep.subr.bf16.mxu0 0
        %1460 = vmatpush2.bf16.msra.mxu0 0
        %1461 = vmatprep.subr.bf16.mxu0 0
        %1462 = vmatpush2.bf16.msra.mxu0 0
        %1463 = vmatprep.subr.bf16.mxu0 0
        %1464 = vmatpush2.bf16.msra.mxu0 0
        %1465 = vmatprep.subr.bf16.mxu0 0
        %1466 = vmatpush2.bf16.msra.mxu0 0
        %1467 = vmatprep.subr.bf16.mxu0 0
        %1468 = vmatpush2.bf16.msra.mxu0 0
        %1469 = vmatprep.subr.bf16.mxu0 0
        %1470 = vmatpush2.bf16.msra.mxu0 0
        %1471 = vmatprep.subr.bf16.mxu0 0
        %1472 = vmatpush2.bf16.msra.mxu0 0
        %1473 = vmatprep.mubr.bf16.mxu0 0
        %1474 = vmatmul.mubr.bf16.gmra.mxu0 %v1348
        %v1475 = vpop.f32.mrf.mxu0
        %v1476 = vadd.f32 %v1292, %v1475
        %v1477 = vpop.f32.mrf.mxu0
        %v1478 = vpop.f32.mrf.mxu0
        %v1479 = vadd.f32 %v1293, %v1478
        %v1480 = vpop.f32.mrf.mxu0
        %1481 = vdwg.mxu0
        %v1482 = vadd.f32 %v1389, %v1476
        %v1483 = vadd.f32 %v1392, %v1479
        %v1484 = vxor.u32 %v1482, 2147483648
        %v1485 = vxor.u32 %v1483, 2147483648
        %v1486 = vmul.f32 %v1484, 1.442695
        %v1487 = vpow.pop %v1486
        %v1488 = vmul.f32 %v1485, 1.442695
        %v1489 = vpow.pop %v1488
        %v1490 = vadd.f32 %v1487, 1.0
        %v1491 = vadd.f32 %v1489, 1.0
        %v1492 = vrcp.pop %v1490
        %v1493 = vmul.f32 1.0, %v1492
        %v1494 = vrcp.pop %v1491
        %v1495 = vmul.f32 1.0, %v1494
        %v1496 = vpack.c.bf16 %v1275, %v1274
        %1497 = vmatprep.subr.bf16.mxu0 0
        %1498 = vmatpush1.bf16.msra.mxu0 0
        %1499 = vmatprep.subr.bf16.mxu0 0
        %1500 = vmatpush1.bf16.msra.mxu0 0
        %1501 = vmatprep.subr.bf16.mxu0 0
        %1502 = vmatpush1.bf16.msra.mxu0 0
        %1503 = vmatprep.subr.bf16.mxu0 0
        %1504 = vmatpush1.bf16.msra.mxu0 0
        %1505 = vmatprep.subr.bf16.mxu0 0
        %1506 = vmatpush1.bf16.msra.mxu0 0
        %1507 = vmatprep.subr.bf16.mxu0 0
        %1508 = vmatpush1.bf16.msra.mxu0 0
        %1509 = vmatprep.subr.bf16.mxu0 0
        %1510 = vmatpush1.bf16.msra.mxu0 0
        %1511 = vmatprep.subr.bf16.mxu0 0
        %1512 = vmatpush1.bf16.msra.mxu0 %v1496
        %1513 = vmatprep.subr.bf16.mxu0 0
        %1514 = vmatpush2.bf16.msra.mxu0 0
        %1515 = vmatprep.subr.bf16.mxu0 0
        %1516 = vmatpush2.bf16.msra.mxu0 0
        %1517 = vmatprep.subr.bf16.mxu0 0
        %1518 = vmatpush2.bf16.msra.mxu0 0
        %1519 = vmatprep.subr.bf16.mxu0 0
        %1520 = vmatpush2.bf16.msra.mxu0 0
        %1521 = vmatprep.subr.bf16.mxu0 0
        %1522 = vmatpush2.bf16.msra.mxu0 0
        %1523 = vmatprep.subr.bf16.mxu0 0
        %1524 = vmatpush2.bf16.msra.mxu0 0
        %1525 = vmatprep.subr.bf16.mxu0 0
        %1526 = vmatpush2.bf16.msra.mxu0 0
        %1527 = vmatprep.subr.bf16.mxu0 0
        %1528 = vmatpush2.bf16.msra.mxu0 0
        %1529 = vmatprep.mubr.bf16.mxu0 0
        %1530 = vmatmul.mubr.bf16.gmra.mxu0 %v1297
        %v1531 = vpop.f32.mrf.mxu0
        %v1532 = vadd.f32 %v1289, %v1531
        %v1533 = vpop.f32.mrf.mxu0
        %v1534 = vpop.f32.mrf.mxu0
        %v1535 = vpop.f32.mrf.mxu0
        %1536 = vdwg.mxu0
        %v1537 = vmax.f32 %v1532, 0.0
        %v1538 = vpack.c.bf16 %v1537, %v1537
        %v1540 = vsel %vm1350, %v1538, 0
        %1542 = vmatprep.subr.bf16.mxu0 0
        %1543 = vmatpush1.bf16.msra.mxu0 0
        %1544 = vmatprep.subr.bf16.mxu0 0
        %1545 = vmatpush1.bf16.msra.mxu0 0
        %1546 = vmatprep.subr.bf16.mxu0 0
        %1547 = vmatpush1.bf16.msra.mxu0 0
        %1548 = vmatprep.subr.bf16.mxu0 0
        %1549 = vmatpush1.bf16.msra.mxu0 0
        %1550 = vmatprep.subr.bf16.mxu0 0
        %1551 = vmatpush1.bf16.msra.mxu0 0
        %1552 = vmatprep.subr.bf16.mxu0 0
        %1553 = vmatpush1.bf16.msra.mxu0 0
        %1554 = vmatprep.subr.bf16.mxu0 0
        %1555 = vmatpush1.bf16.msra.mxu0 0
        %1556 = vmatprep.subr.bf16.mxu0 0
        %1557 = vmatpush1.bf16.msra.mxu0 %v1540
        %1558 = vmatprep.subr.bf16.mxu0 0
        %1559 = vmatpush2.bf16.msra.mxu0 0
        %1560 = vmatprep.subr.bf16.mxu0 0
        %1561 = vmatpush2.bf16.msra.mxu0 0
        %1562 = vmatprep.subr.bf16.mxu0 0
        %1563 = vmatpush2.bf16.msra.mxu0 0
        %1564 = vmatprep.subr.bf16.mxu0 0
        %1565 = vmatpush2.bf16.msra.mxu0 0
        %1566 = vmatprep.subr.bf16.mxu0 0
        %1567 = vmatpush2.bf16.msra.mxu0 0
        %1568 = vmatprep.subr.bf16.mxu0 0
        %1569 = vmatpush2.bf16.msra.mxu0 0
        %1570 = vmatprep.subr.bf16.mxu0 0
        %1571 = vmatpush2.bf16.msra.mxu0 0
        %1572 = vmatprep.subr.bf16.mxu0 0
        %1573 = vmatpush2.bf16.msra.mxu0 0
        %1574 = vmatprep.mubr.bf16.mxu0 0
        %1575 = vmatmul.mubr.bf16.gmra.mxu0 %v1348
        %v1576 = vpop.f32.mrf.mxu0
        %v1577 = vadd.f32 %v1292, %v1576
        %v1578 = vpop.f32.mrf.mxu0
        %v1579 = vpop.f32.mrf.mxu0
        %v1580 = vadd.f32 %v1293, %v1579
        %v1581 = vpop.f32.mrf.mxu0
        %1582 = vdwg.mxu0
        %v1583 = vpack.c.bf16 %v1287, %v1285
        %1584 = vmatprep.subr.bf16.mxu0 0
        %1585 = vmatpush1.bf16.msra.mxu0 0
        %1586 = vmatprep.subr.bf16.mxu0 0
        %1587 = vmatpush1.bf16.msra.mxu0 0
        %1588 = vmatprep.subr.bf16.mxu0 0
        %1589 = vmatpush1.bf16.msra.mxu0 0
        %1590 = vmatprep.subr.bf16.mxu0 0
        %1591 = vmatpush1.bf16.msra.mxu0 0
        %1592 = vmatprep.subr.bf16.mxu0 0
        %1593 = vmatpush1.bf16.msra.mxu0 0
        %1594 = vmatprep.subr.bf16.mxu0 0
        %1595 = vmatpush1.bf16.msra.mxu0 0
        %1596 = vmatprep.subr.bf16.mxu0 0
        %1597 = vmatpush1.bf16.msra.mxu0 0
        %1598 = vmatprep.subr.bf16.mxu0 0
        %1599 = vmatpush1.bf16.msra.mxu0 %v1583
        %1600 = vmatprep.subr.bf16.mxu0 0
        %1601 = vmatpush2.bf16.msra.mxu0 0
        %1602 = vmatprep.subr.bf16.mxu0 0
        %1603 = vmatpush2.bf16.msra.mxu0 0
        %1604 = vmatprep.subr.bf16.mxu0 0
        %1605 = vmatpush2.bf16.msra.mxu0 0
        %1606 = vmatprep.subr.bf16.mxu0 0
        %1607 = vmatpush2.bf16.msra.mxu0 0
        %1608 = vmatprep.subr.bf16.mxu0 0
        %1609 = vmatpush2.bf16.msra.mxu0 0
        %1610 = vmatprep.subr.bf16.mxu0 0
        %1611 = vmatpush2.bf16.msra.mxu0 0
        %1612 = vmatprep.subr.bf16.mxu0 0
        %1613 = vmatpush2.bf16.msra.mxu0 0
        %1614 = vmatprep.subr.bf16.mxu0 0
        %1615 = vmatpush2.bf16.msra.mxu0 0
        %1616 = vmatprep.mubr.bf16.mxu0 0
        %1617 = vmatmul.mubr.bf16.gmra.mxu0 %v1297
        %v1618 = vpop.f32.mrf.mxu0
        %v1619 = vadd.f32 %v1289, %v1618
        %v1620 = vpop.f32.mrf.mxu0
        %v1621 = vpop.f32.mrf.mxu0
        %v1622 = vpop.f32.mrf.mxu0
        %1623 = vdwg.mxu0
        %v1624 = vmax.f32 %v1619, 0.0
        %v1625 = vpack.c.bf16 %v1624, %v1624
        %v1627 = vsel %vm1350, %v1625, 0
        %1629 = vmatprep.subr.bf16.mxu0 0
        %1630 = vmatpush1.bf16.msra.mxu0 0
        %1631 = vmatprep.subr.bf16.mxu0 0
        %1632 = vmatpush1.bf16.msra.mxu0 0
        %1633 = vmatprep.subr.bf16.mxu0 0
        %1634 = vmatpush1.bf16.msra.mxu0 0
        %1635 = vmatprep.subr.bf16.mxu0 0
        %1636 = vmatpush1.bf16.msra.mxu0 0
        %1637 = vmatprep.subr.bf16.mxu0 0
        %1638 = vmatpush1.bf16.msra.mxu0 0
        %1639 = vmatprep.subr.bf16.mxu0 0
        %1640 = vmatpush1.bf16.msra.mxu0 0
        %1641 = vmatprep.subr.bf16.mxu0 0
        %1642 = vmatpush1.bf16.msra.mxu0 0
        %1643 = vmatprep.subr.bf16.mxu0 0
        %1644 = vmatpush1.bf16.msra.mxu0 %v1627
        %1645 = vmatprep.subr.bf16.mxu0 0
        %1646 = vmatpush2.bf16.msra.mxu0 0
        %1647 = vmatprep.subr.bf16.mxu0 0
        %1648 = vmatpush2.bf16.msra.mxu0 0
        %1649 = vmatprep.subr.bf16.mxu0 0
        %1650 = vmatpush2.bf16.msra.mxu0 0
        %1651 = vmatprep.subr.bf16.mxu0 0
        %1652 = vmatpush2.bf16.msra.mxu0 0
        %1653 = vmatprep.subr.bf16.mxu0 0
        %1654 = vmatpush2.bf16.msra.mxu0 0
        %1655 = vmatprep.subr.bf16.mxu0 0
        %1656 = vmatpush2.bf16.msra.mxu0 0
        %1657 = vmatprep.subr.bf16.mxu0 0
        %1658 = vmatpush2.bf16.msra.mxu0 0
        %1659 = vmatprep.subr.bf16.mxu0 0
        %1660 = vmatpush2.bf16.msra.mxu0 0
        %1661 = vmatprep.mubr.bf16.mxu0 0
        %1662 = vmatmul.mubr.bf16.gmra.mxu0 %v1348
        %v1663 = vpop.f32.mrf.mxu0
        %v1664 = vadd.f32 %v1292, %v1663
        %v1665 = vpop.f32.mrf.mxu0
        %v1666 = vpop.f32.mrf.mxu0
        %v1667 = vadd.f32 %v1293, %v1666
        %v1668 = vpop.f32.mrf.mxu0
        %1669 = vdwg.mxu0
        %v1670 = vadd.f32 %v1577, %v1664
        %v1671 = vadd.f32 %v1580, %v1667
        %v1672 = vxor.u32 %v1670, 2147483648
        %v1673 = vxor.u32 %v1671, 2147483648
        %v1674 = vmul.f32 %v1672, 1.442695
        %v1675 = vpow.pop %v1674
        %v1676 = vmul.f32 %v1673, 1.442695
        %v1677 = vpow.pop %v1676
        %v1678 = vadd.f32 %v1675, 1.0
        %v1679 = vadd.f32 %v1677, 1.0
        %v1680 = vrcp.pop %v1678
        %v1681 = vmul.f32 1.0, %v1680
        %v1682 = vrcp.pop %v1679
        %v1683 = vmul.f32 1.0, %v1682
        %1685 = vset.pattern.permute.xlu0 0
        %1686 = vperm.xlu0 %1685, %v1493
        %v1687 = vpop.permute.xlu0 %1686
        %1690 = vset.pattern.permute.xlu0 0
        %1691 = vperm.xlu0 %1690, %v1495
        %v1692 = vpop.permute.xlu0 %1691
        %1695 = vset.pattern.permute.xlu0 0
        %1696 = vperm.xlu0 %1695, %v1681
        %v1697 = vpop.permute.xlu0 %1696
        %1700 = vset.pattern.permute.xlu0 0
        %1701 = vperm.xlu0 %1700, %v1683
        %v1702 = vpop.permute.xlu0 %1701
        %v1704 = vmul.f32 %v1256, %v1687
        %v1705 = vmul.f32 %v1257, %v1692
        %v1706 = vmul.f32 %v1258, %v1697
        %v1707 = vmul.f32 %v1259, %v1702
        %v1708 = vadd.f32 %v1704, %v1705
        %v1709 = vrot.slane %v1708, 4
        %v1710 = vadd.f32 %v1708, %v1709
        %v1711 = vrot.slane %v1710, 2
        %v1712 = vadd.f32 %v1710, %v1711
        %v1713 = vrot.slane %v1712, 1
        %v1714 = vadd.f32 %v1712, %v1713
        %v1715 = vadd.f32 %v1706, %v1707
        %v1716 = vrot.slane %v1715, 4
        %v1717 = vadd.f32 %v1715, %v1716
        %v1718 = vrot.slane %v1717, 2
        %v1719 = vadd.f32 %v1717, %v1718
        %v1720 = vrot.slane %v1719, 1
        %v1721 = vadd.f32 %v1719, %v1720
        %v1722 = vrcp.pop 16.0
        %v1723 = vmul.f32 %v1714, %v1722
        %v1724 = vmul.f32 %v1721, %v1722
        %v1725 = vmax.f32 %v1704, %v1705
        %v1726 = vrot.slane %v1725, 4
        %v1727 = vmax.f32 %v1725, %v1726
        %v1728 = vrot.slane %v1727, 2
        %v1729 = vmax.f32 %v1727, %v1728
        %v1730 = vrot.slane %v1729, 1
        %v1731 = vmax.f32 %v1729, %v1730
        %v1732 = vmax.f32 %v1706, %v1707
        %v1733 = vrot.slane %v1732, 4
        %v1734 = vmax.f32 %v1732, %v1733
        %v1735 = vrot.slane %v1734, 2
        %v1736 = vmax.f32 %v1734, %v1735
        %v1737 = vrot.slane %v1736, 1
        %v1738 = vmax.f32 %v1736, %v1737
        %s1739 = sld [smem:[#allocation8 + %s34]]
        %v1740 = vstv %s1739
        %v1741 = vadd.f32 %v1740, 0.0
        %1742 = vrot.lane.b32.xlu0 %v1723, 1
        %v1743 = vpop.permute.xlu0 %1742
        %1744 = vrot.lane.b32.xlu0 %v1724, 1
        %v1745 = vpop.permute.xlu0 %1744
        %1746 = vrot.lane.b32.xlu0 %v1731, 1
        %v1747 = vpop.permute.xlu0 %1746
        %1748 = vrot.lane.b32.xlu0 %v1738, 1
        %v1749 = vpop.permute.xlu0 %1748
        %s1750 = smul.u32 %s34, 128
        %s1751 = sld [smem:[#allocation6 + %s1750]]
        %v1752 = vstv %s1751
        %v1753 = vmul.f32 %v1752, %v1743
        %v1754 = vmul.f32 %v1752, %v1745
        %v1755 = vadd.f32 %v1741, %v1753
        %v1756 = vadd.f32 %v1741, %v1754
        %s1757 = sadd.s32 %s1750, 1
        %s1758 = sld [smem:[#allocation6 + %s1757]]
        %v1759 = vstv %s1758
        %v1760 = vmul.f32 %v1759, %v1747
        %v1761 = vmul.f32 %v1759, %v1749
        %v1762 = vadd.f32 %v1755, %v1760
        %v1763 = vadd.f32 %v1756, %v1761
        %s1764 = sadd.s32 %s1750, 2
        %s1765 = sld [smem:[#allocation6 + %s1764]]
        %v1766 = vstv %s1765
        %v1767 = vmul.f32 %v1766, %v1723
        %v1768 = vmul.f32 %v1766, %v1724
        %v1769 = vadd.f32 %v1762, %v1767
        %v1770 = vadd.f32 %v1763, %v1768
        %s1771 = sadd.s32 %s1750, 3
        %s1772 = sld [smem:[#allocation6 + %s1771]]
        %v1773 = vstv %s1772
        %v1774 = vmul.f32 %v1773, %v1731
        %v1775 = vmul.f32 %v1773, %v1738
        %v1776 = vadd.f32 %v1769, %v1774
        %v1777 = vadd.f32 %v1770, %v1775
        %1778 = vrot.lane.b32.xlu0 %v1723, 127
        %v1779 = vpop.permute.xlu0 %1778
        %1780 = vrot.lane.b32.xlu0 %v1724, 127
        %v1781 = vpop.permute.xlu0 %1780
        %1782 = vrot.lane.b32.xlu0 %v1731, 127
        %v1783 = vpop.permute.xlu0 %1782
        %1784 = vrot.lane.b32.xlu0 %v1738, 127
        %v1785 = vpop.permute.xlu0 %1784
        %s1786 = sadd.s32 %s1750, 4
        %s1787 = sld [smem:[#allocation6 + %s1786]]
        %v1788 = vstv %s1787
        %v1789 = vmul.f32 %v1788, %v1779
        %v1790 = vmul.f32 %v1788, %v1781
        %v1791 = vadd.f32 %v1776, %v1789
        %v1792 = vadd.f32 %v1777, %v1790
        %s1793 = sadd.s32 %s1750, 5
        %s1794 = sld [smem:[#allocation6 + %s1793]]
        %v1795 = vstv %s1794
        %v1796 = vmul.f32 %v1795, %v1783
        %v1797 = vmul.f32 %v1795, %v1785
        %v1798 = vadd.f32 %v1791, %v1796
        %v1799 = vadd.f32 %v1792, %v1797
        %v1800 = vxor.u32 %v1798, 2147483648
        %v1801 = vxor.u32 %v1799, 2147483648
        %v1802 = vmul.f32 %v1800, 1.442695
        %v1803 = vpow.pop %v1802
        %v1804 = vmul.f32 %v1801, 1.442695
        %v1805 = vpow.pop %v1804
        %v1806 = vadd.f32 %v1803, 1.0
        %v1807 = vadd.f32 %v1805, 1.0
        %v1808 = vrcp.pop %v1806
        %v1809 = vmul.f32 1.0, %v1808
        %v1810 = vrcp.pop %v1807
        %v1811 = vmul.f32 1.0, %v1810
        %v1812 = vlaneseq
        %v1813 = vshrl.u32 %v1812, 7
        %v1814 = vsub.s32 0, %v1813
        %v1815 = vrot.slane %v1809, %v1814
        %v1816 = vlaneseq
        %v1817 = vshrl.u32 %v1816, 7
        %v1818 = vsub.s32 0, %v1817
        %v1819 = vrot.slane %v1811, %v1818
        %v1820 = vmul.f32 %v1704, %v1815
        %v1821 = vmul.f32 %v1705, %v1815
        %v1822 = vmul.f32 %v1706, %v1819
        %v1823 = vmul.f32 %v1707, %v1819
        %v1824 = vpack.c.bf16 %v1821, %v1820
        %v1825 = vpack.c.bf16 %v1823, %v1822
        %v1826 = vld [vmem:[%s846] sm:$0xf]
        %v1827 = vld [vmem:[%s846 + $0x4] sm:$0xf]
        %v1828 = vld [vmem:[%s846 + $0x8] sm:$0xf]
        %v1829 = vld [vmem:[%s846 + $0xc] sm:$0xf]
        %v1830 = vld [vmem:[%s846 + $0x10] sm:$0xf]
        %v1831 = vld [vmem:[%s846 + $0x14] sm:$0xf]
        %v1832 = vld [vmem:[%s846 + $0x18] sm:$0xf]
        %v1833 = vld [vmem:[%s846 + $0x1c] sm:$0xf]
        %v1834 = vld [vmem:[%s846 + $0x20] sm:$0xf]
        %v1835 = vld [vmem:[%s846 + $0x24] sm:$0xf]
        %v1836 = vld [vmem:[%s846 + $0x28] sm:$0xf]
        %v1837 = vld [vmem:[%s846 + $0x2c] sm:$0xf]
        %v1838 = vld [vmem:[%s846 + $0x30] sm:$0xf]
        %v1839 = vld [vmem:[%s846 + $0x34] sm:$0xf]
        %v1840 = vld [vmem:[%s846 + $0x38] sm:$0xf]
        %v1841 = vld [vmem:[%s846 + $0x3c] sm:$0xf]
        %v1842 = vld [vmem:[%s849] sm:$0x1]
        %v1844 = vlaneseq
        %v1845 = vshrl.u32 %v1844, 7
        %v1846 = vsub.s32 0, %v1845
        %v1847 = vrot.slane %v1842, %v1846
        %v1865 = vunpack.c.l.b16 %v1826
        %v1866 = vunpack.c.l.b16 %v1827
        %v1867 = vunpack.c.l.b16 %v1828
        %v1868 = vunpack.c.l.b16 %v1829
        %v1869 = vunpack.c.l.b16 %v1830
        %v1870 = vunpack.c.l.b16 %v1831
        %v1871 = vunpack.c.l.b16 %v1832
        %v1872 = vunpack.c.l.b16 %v1833
        %v1873 = vunpack.c.l.b16 %v1834
        %v1874 = vunpack.c.l.b16 %v1835
        %v1875 = vunpack.c.l.b16 %v1836
        %v1876 = vunpack.c.l.b16 %v1837
        %v1877 = vunpack.c.l.b16 %v1838
        %v1878 = vunpack.c.l.b16 %v1839
        %v1879 = vunpack.c.l.b16 %v1840
        %v1880 = vunpack.c.l.b16 %v1841
        %v1881 = vpack.c.b16 %v1866, %v1865
        %v1882 = vpack.c.b16 %v1868, %v1867
        %v1883 = vpack.c.b16 %v1870, %v1869
        %v1884 = vpack.c.b16 %v1872, %v1871
        %v1885 = vpack.c.b16 %v1874, %v1873
        %v1886 = vpack.c.b16 %v1876, %v1875
        %v1887 = vpack.c.b16 %v1878, %v1877
        %v1888 = vpack.c.b16 %v1880, %v1879
        %1897 = vmatprep.subr.bf16.mxu0 0
        %1898 = vmatpush1.bf16.msra.mxu0 %v1888
        %1899 = vmatprep.subr.bf16.mxu0 0
        %1900 = vmatpush1.bf16.msra.mxu0 %v1887
        %1901 = vmatprep.subr.bf16.mxu0 0
        %1902 = vmatpush1.bf16.msra.mxu0 %v1886
        %1903 = vmatprep.subr.bf16.mxu0 0
        %1904 = vmatpush1.bf16.msra.mxu0 %v1885
        %1905 = vmatprep.subr.bf16.mxu0 0
        %1906 = vmatpush1.bf16.msra.mxu0 %v1884
        %1907 = vmatprep.subr.bf16.mxu0 0
        %1908 = vmatpush1.bf16.msra.mxu0 %v1883
        %1909 = vmatprep.subr.bf16.mxu0 0
        %1910 = vmatpush1.bf16.msra.mxu0 %v1882
        %1911 = vmatprep.subr.bf16.mxu0 0
        %1912 = vmatpush1.bf16.msra.mxu0 %v1881
        %1913 = vmatprep.subr.bf16.mxu0 0
        %1914 = vmatpush2.bf16.msra.mxu0 0
        %1915 = vmatprep.subr.bf16.mxu0 0
        %1916 = vmatpush2.bf16.msra.mxu0 0
        %1917 = vmatprep.subr.bf16.mxu0 0
        %1918 = vmatpush2.bf16.msra.mxu0 0
        %1919 = vmatprep.subr.bf16.mxu0 0
        %1920 = vmatpush2.bf16.msra.mxu0 0
        %1921 = vmatprep.subr.bf16.mxu0 0
        %1922 = vmatpush2.bf16.msra.mxu0 0
        %1923 = vmatprep.subr.bf16.mxu0 0
        %1924 = vmatpush2.bf16.msra.mxu0 0
        %1925 = vmatprep.subr.bf16.mxu0 0
        %1926 = vmatpush2.bf16.msra.mxu0 0
        %1927 = vmatprep.subr.bf16.mxu0 0
        %1928 = vmatpush2.bf16.msra.mxu0 0
        %1929 = vmatprep.mubr.bf16.mxu0 0
        %1930 = vmatmul.mubr.bf16.gmra.mxu0 %v1824
        %v1931 = vpop.f32.mrf.mxu0
        %v1932 = vadd.f32 %v1847, %v1931
        %v1933 = vpop.f32.mrf.mxu0
        %v1934 = vpop.f32.mrf.mxu0
        %v1935 = vadd.f32 %v1847, %v1934
        %v1936 = vpop.f32.mrf.mxu0
        %1937 = vmatprep.mubr.bf16.mxu0 0
        %1938 = vmatmul.mubr.bf16.gmra.mxu0 %v1825
        %v1939 = vpop.f32.mrf.mxu0
        %v1940 = vadd.f32 %v1847, %v1939
        %v1941 = vpop.f32.mrf.mxu0
        %v1942 = vpop.f32.mrf.mxu0
        %v1943 = vadd.f32 %v1847, %v1942
        %v1944 = vpop.f32.mrf.mxu0
        %1945 = vdwg.mxu0
        %v1946 = vadd.f32 %v1932, %v1054
        %v1947 = vadd.f32 %v1935, %v1055
        %v1948 = vadd.f32 %v1940, %v1056
        %v1949 = vadd.f32 %v1943, %v1057
        %v1950 = vld [vmem:[%s854] sm:$0xf]
        %v1951 = vld [vmem:[%s854 + $0x4] sm:$0xf]
        %v1952 = vld [vmem:[%s859] sm:$0xff]
        %v1953 = vld [vmem:[%s859 + $0x8] sm:$0xff]
        %v1954 = vpack.c.bf16 %v1947, %v1946
        %v1955 = vpack.c.bf16 %v1949, %v1948
        %1957 = vset.pattern.permute.xlu0 0
        %1958 = vperm.xlu0 %1957, %v1952
        %v1959 = vpop.permute.xlu0 %1958
        %1962 = vset.pattern.permute.xlu0 0
        %1963 = vperm.xlu0 %1962, %v1953
        %v1964 = vpop.permute.xlu0 %1963
        %v1968 = vunpack.c.l.b16 %v1950
        %v1969 = vunpack.c.l.b16 %v1951
        %v1970 = vpack.c.b16 %v1969, %v1968
        %v1972 = vsel %vm1295, %v1970, 0
        %1974 = vmatprep.subr.bf16.mxu0 0
        %1975 = vmatpush1.bf16.msra.mxu0 0
        %1976 = vmatprep.subr.bf16.mxu0 0
        %1977 = vmatpush1.bf16.msra.mxu0 0
        %1978 = vmatprep.subr.bf16.mxu0 0
        %1979 = vmatpush1.bf16.msra.mxu0 0
        %1980 = vmatprep.subr.bf16.mxu0 0
        %1981 = vmatpush1.bf16.msra.mxu0 0
        %1982 = vmatprep.subr.bf16.mxu0 0
        %1983 = vmatpush1.bf16.msra.mxu0 0
        %1984 = vmatprep.subr.bf16.mxu0 0
        %1985 = vmatpush1.bf16.msra.mxu0 0
        %1986 = vmatprep.subr.bf16.mxu0 0
        %1987 = vmatpush1.bf16.msra.mxu0 0
        %1988 = vmatprep.subr.bf16.mxu0 %v1955
        %1989 = vmatpush1.bf16.msra.mxu0 %v1954
        %1990 = vmatprep.subr.bf16.mxu0 0
        %1991 = vmatpush2.bf16.msra.mxu0 0
        %1992 = vmatprep.subr.bf16.mxu0 0
        %1993 = vmatpush2.bf16.msra.mxu0 0
        %1994 = vmatprep.subr.bf16.mxu0 0
        %1995 = vmatpush2.bf16.msra.mxu0 0
        %1996 = vmatprep.subr.bf16.mxu0 0
        %1997 = vmatpush2.bf16.msra.mxu0 0
        %1998 = vmatprep.subr.bf16.mxu0 0
        %1999 = vmatpush2.bf16.msra.mxu0 0
        %2000 = vmatprep.subr.bf16.mxu0 0
        %2001 = vmatpush2.bf16.msra.mxu0 0
        %2002 = vmatprep.subr.bf16.mxu0 0
        %2003 = vmatpush2.bf16.msra.mxu0 0
        %2004 = vmatprep.subr.bf16.mxu0 0
        %2005 = vmatpush2.bf16.msra.mxu0 0
        %2006 = vmatprep.mubr.bf16.mxu0 0
        %2007 = vmatmul.mubr.bf16.gmra.mxu0 %v1972
        %v2008 = vpop.f32.mrf.mxu0
        %v2009 = vadd.f32 %v1959, %v2008
        %v2010 = vpop.f32.mrf.mxu0
        %v2011 = vadd.f32 %v1959, %v2010
        %v2012 = vpop.f32.mrf.mxu0
        %v2013 = vadd.f32 %v1964, %v2012
        %v2014 = vpop.f32.mrf.mxu0
        %v2015 = vadd.f32 %v1964, %v2014
        %2016 = vdwg.mxu0
        %v2017 = vsel %vm1080, %v2009, 0.0
        %v2018 = vsel %vm1080, %v2013, 0.0
        %v2019 = vsel %vm1080, %v2011, 0.0
        %v2020 = vsel %vm1080, %v2015, 0.0
        %2021 = vst [vmem:[#allocation2] sm:$0xff] %v2017
        %2022 = vst [vmem:[#allocation2 + $0x8] sm:$0xff] %v2018
        %2023 = vst [vmem:[#allocation2 + $0x10] sm:$0xff] %v2019
        %2024 = vst [vmem:[#allocation2 + $0x18] sm:$0xff] %v2020
        // Predicated region
        $region117: #{tpu_custom_call.1} parent=99 // pred_check
          %p2025 = pneg %p1172
        $region118: #{tpu_custom_call.1} parent=99 // pred_check_branch
          %2027 = sbr.rel (%p2025) target = $region120
        $region119: #{tpu_custom_call.1} parent=99 // pred_region
          %2028 = vst.msk [vmem:[#allocation9] sm:$0xff] %vm1295, %v2017
          %2029 = vst.msk [vmem:[#allocation9 + $0x8] sm:$0xff] %vm1295, %v2018
          %2030 = vst.msk [vmem:[#allocation9 + $0x10] sm:$0xff] %vm1295, %v2019
          %2031 = vst.msk [vmem:[#allocation9 + $0x18] sm:$0xff] %vm1295, %v2020
        $region120: #{tpu_custom_call.1} parent=99 // pred_fallthru
          _
        // Predicated region
        $region121: #{tpu_custom_call.1} parent=99 // pred_check
          %p2032 = pneg %p527
        $region122: #{tpu_custom_call.1} parent=99 // pred_check_branch
          %2034 = sbr.rel (%p2032) target = $region124
        $region123: #{tpu_custom_call.1} parent=99 // pred_region
          %s2036 = ssub.s32 512, 512
          %2037 = vsyncadd [#allocation4], %s2036
          %s2038 = sshll.u32 [#allocation9], 4
          %s2039 = int_to_ptr.vmem [resolvable:$true] %s2038
          %2044 = dma.vmem_to_hbm [thread:$0]  %s2039, 512, %s20, [#allocation4], 128, 128, 8
        $region124: #{tpu_custom_call.1} parent=99 // pred_fallthru
          _
        // Predicated region
        $region125: #{tpu_custom_call.1} parent=99 // pred_check
          %p2045 = pneg %p527
        $region126: #{tpu_custom_call.1} parent=99 // pred_check_branch
          %2047 = sbr.rel (%p2045) target = $region128
        $region127: #{tpu_custom_call.1} parent=99 // pred_region
          %2048 = dma.done [#allocation4], 512
        $region128: #{tpu_custom_call.1} parent=99 // pred_fallthru
          _
      $region100: #{tpu_custom_call.1} parent=5 // pred_fallthru
        _
      %p2049 = scmp.le.s32.totalorder 2, %s29
      // Predicated region
      $region129: #{tpu_custom_call.1} parent=5 // pred_check
        %p2050 = pneg %p2049
      $region130: #{tpu_custom_call.1} parent=5 // pred_check_branch
        %2052 = sbr.rel (%p2050) target = $region132
      $region131: #{tpu_custom_call.1} parent=5 // pred_region
        %s2053 = ssub.s32 %s29, 2
      $region132: #{tpu_custom_call.1} parent=5 // pred_fallthru
        _
    $region6: #{tpu_custom_call.1} parent=1 // loop_footer
      %s33 = sadd.s32 1, %s29
    $region7: #{tpu_custom_call.1} parent=1 // loop_footer_branch
      %28 = sbr.rel target = $region3
    $region8: #{tpu_custom_call.1} parent=1 // loop_exit
      _
    %2054 = vsyncpa [#allocation4], 1
    %s2055 = scalar_lea.sflag [#allocation4], 1
    %2056 = vsyncpa %s2055, 1
    %2057 = vsyncpa [#allocation5], 1
    %s2058 = scalar_lea.sflag [#allocation5], 1
    %2059 = vsyncpa %s2058, 1
    %2060 = vsyncpa [#allocation7], 1

</llo_original>
